<compile_context>
chip_gen: v5e
topology: v5e:2x2
jax: 0.10.0
libtpu: 0.0.40
codegen_flags: <defaults>
</compile_context>

<pallas_src>
import functools

import jax
import jax.numpy as jnp
from jax.experimental import pallas as pl
from jax.experimental.pallas import tpu as pltpu


# ----------------------------- Pallas kernels ------------------------------

def _conv_lrelu_kernel(w_ref, p_ref, o_ref, *, slope):
    # (Cout, K) @ (K, tm) -> (Cout, tm) on the MXU, LeakyReLU fused.
    y = jnp.dot(w_ref[...], p_ref[...], preferred_element_type=jnp.float32)
    o_ref[...] = jnp.where(y >= 0, y, slope * y).astype(o_ref.dtype)


def _conv_bn_lrelu_kernel(w_ref, p_ref, g_ref, b_ref, o_ref, *, eps, slope):
    # Conv (as matmul) + BatchNorm2d (biased batch stats over M, per channel
    # row) + LeakyReLU, whole layer in one VMEM block. Stats reduce over the
    # lane axis (M), which is lane-dense.
    y = jnp.dot(w_ref[...], p_ref[...], preferred_element_type=jnp.float32)
    mean = jnp.mean(y, axis=1, keepdims=True)
    var = jnp.mean(jnp.square(y - mean), axis=1, keepdims=True)
    z = (y - mean) * jax.lax.rsqrt(var + eps) * g_ref[...] + b_ref[...]
    o_ref[...] = jnp.where(z >= 0, z, slope * z).astype(o_ref.dtype)


def _tail_kernel(w4_ref, p_ref, g_ref, b_ref, w5t_ref, pool_ref, o_ref, *,
                 eps, slope):
    # Fused network tail: conv4 + BN + LeakyReLU + conv5 (full-map dot) +
    # sigmoid, one pallas_call.
    y = jnp.dot(w4_ref[...], p_ref[...], preferred_element_type=jnp.float32)
    mean = jnp.mean(y, axis=1, keepdims=True)
    var = jnp.mean(jnp.square(y - mean), axis=1, keepdims=True)
    z = (y - mean) * jax.lax.rsqrt(var + eps) * g_ref[...] + b_ref[...]
    z = jnp.where(z >= 0, z, slope * z)
    # Final 4x4 conv covers the whole 4x4 feature map: elementwise multiply
    # with the per-column-tiled w5 weights (VPU), reduce over channels
    # (sublane, XLU), then pool the Ho*Wo columns of each image.
    s = jnp.sum(z * w5t_ref[...], axis=0, keepdims=True)              # (1, M)
    logits = jnp.dot(s, pool_ref[...], preferred_element_type=jnp.float32)
    o_ref[...] = jax.nn.sigmoid(logits)                               # (1, N)


# ------------------------------- JAX glue ----------------------------------

def im2col_t(x_cnhw, kh, kw, stride, pad):
    """x:(C,N,H,W) -> transposed patch matrix (C*kh*kw, N*Ho*Wo).

    Row index = c*kh*kw + i*kw + j (matches OIHW weight reshape); column
    index = n*Ho*Wo + ho*Wo + wo, so the kernel output (Cout, M) reshapes
    straight back to (Cout, N, Ho, Wo) with NO transpose.
    """
    C, N, H, W = x_cnhw.shape
    xp = jnp.pad(x_cnhw, ((0, 0), (0, 0), (pad, pad), (pad, pad)))
    Ho = (H + 2 * pad - kh) // stride + 1
    Wo = (W + 2 * pad - kw) // stride + 1
    taps = []
    for i in range(kh):
        for j in range(kw):
            taps.append(
                xp[:, :, i:i + stride * Ho:stride, j:j + stride * Wo:stride])
    p = jnp.stack(taps, axis=1)                 # (C, kh*kw, N, Ho, Wo)
    return p.reshape(C * kh * kw, N * Ho * Wo), Ho, Wo


def conv_lrelu(x_cnhw, w_oihw, stride, pad, slope=0.2, tm_max=512):
    """Layer-1 style conv + LeakyReLU, lane-dense output, M-tiled grid."""
    Cout, Cin, KH, KW = w_oihw.shape
    _, N, _, _ = x_cnhw.shape
    p, Ho, Wo = im2col_t(x_cnhw, KH, KW, stride, pad)
    K, M = p.shape
    wmat = w_oihw.reshape(Cout, K).astype(jnp.bfloat16)

    if M > tm_max:
        tm = tm_max
        m_pad = pl.cdiv(M, tm) * tm
    else:
        tm = M
        m_pad = M
    if m_pad != M:
        p = jnp.pad(p, ((0, 0), (0, m_pad - M)))
    p = p.astype(jnp.bfloat16)

    y = pl.pallas_call(
        functools.partial(_conv_lrelu_kernel, slope=slope),
        out_shape=jax.ShapeDtypeStruct((Cout, m_pad), jnp.bfloat16),
        grid_spec=pl.GridSpec(
            grid=(m_pad // tm,),
            in_specs=[
                pl.BlockSpec((Cout, K), lambda i: (0, 0)),
                pl.BlockSpec((K, tm), lambda i: (0, i)),
            ],
            out_specs=pl.BlockSpec((Cout, tm), lambda i: (0, i)),
        ),
        compiler_params=pltpu.CompilerParams(
            dimension_semantics=("parallel",)),
    )(wmat, p)
    if m_pad != M:
        y = y[:, :M]
    return y.reshape(Cout, N, Ho, Wo)


def conv_bn_lrelu(x_cnhw, w_oihw, gamma, beta, stride, pad,
                  eps=1e-5, slope=0.2):
    """Conv + BatchNorm(train-mode batch stats) + LeakyReLU, fused."""
    Cout, Cin, KH, KW = w_oihw.shape
    _, N, _, _ = x_cnhw.shape
    p, Ho, Wo = im2col_t(x_cnhw, KH, KW, stride, pad)
    K, M = p.shape
    wmat = w_oihw.reshape(Cout, K).astype(jnp.bfloat16)
    p = p.astype(jnp.bfloat16)
    # TODO(synk): for large N*H*W, tile over M and accumulate per-channel
    # sum/sumsq in VMEM scratch (two-pass BN) instead of one whole block.
    y = pl.pallas_call(
        functools.partial(_conv_bn_lrelu_kernel, eps=eps, slope=slope),
        out_shape=jax.ShapeDtypeStruct((Cout, M), jnp.bfloat16),
    )(wmat, p,
      gamma.reshape(Cout, 1).astype(jnp.float32),
      beta.reshape(Cout, 1).astype(jnp.float32))
    return y.reshape(Cout, N, Ho, Wo)


def conv_tail(x_cnhw, w4_oihw, gamma, beta, w5_oihw, eps=1e-5, slope=0.2):
    """Fused conv4+BN+LReLU + conv5(4x4,1,0) + sigmoid -> (1, N) logits."""
    C4, _, KH, KW = w4_oihw.shape
    _, N, _, _ = x_cnhw.shape
    p, Ho, Wo = im2col_t(x_cnhw, KH, KW, stride=2, pad=1)
    K4, M4 = p.shape
    _, c4w, k5h, k5w = w5_oihw.shape
    assert c4w == C4 and (k5h, k5w) == (Ho, Wo)   # final conv covers full map
    HW = Ho * Wo

    w4m = w4_oihw.reshape(C4, K4).astype(jnp.bfloat16)
    p = p.astype(jnp.bfloat16)
    # w5 tiled so w5t[c, n*HW + t] = w5[0, c, t//Wo, t%Wo]
    w5t = jnp.tile(w5_oihw.reshape(C4, HW).astype(jnp.float32), (1, N))
    # pool[m, n] = 1 iff column m belongs to image n
    pool = (jnp.arange(M4)[:, None] // HW ==
            jnp.arange(N)[None, :]).astype(jnp.float32)

    out = pl.pallas_call(
        functools.partial(_tail_kernel, eps=eps, slope=slope),
        out_shape=jax.ShapeDtypeStruct((1, N), jnp.float32),
    )(w4m, p,
      gamma.reshape(C4, 1).astype(jnp.float32),
      beta.reshape(C4, 1).astype(jnp.float32),
      w5t, pool)
    return out


# ------------------------------- Model -------------------------------------

def discriminator_forward(x_nchw, p):
    # Single layout conversion NCHW -> CNHW; all layer boundaries below are
    # pure reshapes.
    x = x_nchw.transpose(1, 0, 2, 3)
    h = conv_lrelu(x, p["w1"], stride=2, pad=1)                         # ndf
    h = conv_bn_lrelu(h, p["w2"], p["g2"], p["b2"], stride=2, pad=1)    # 2ndf
    h = conv_bn_lrelu(h, p["w3"], p["g3"], p["b3"], stride=2, pad=1)    # 4ndf
    out = conv_tail(h, p["w4"], p["g4"], p["b4"], p["w5"])              # (1,N)
    N = x_nchw.shape[0]
    return out.reshape(N, 1, 1, 1)


def init_params(key, nc=3, ndf=8):
    # DCGAN-style init: conv weights ~ N(0, 0.02), BN gamma=1, beta=0.
    ks = jax.random.split(key, 5)

    def w(k, cout, cin):
        return 0.02 * jax.random.normal(k, (cout, cin, 4, 4), jnp.float32)

    return {
        "w1": w(ks[0], ndf, nc),
        "w2": w(ks[1], ndf * 2, ndf),
        "g2": jnp.ones((ndf * 2,), jnp.float32),
        "b2": jnp.zeros((ndf * 2,), jnp.float32),
        "w3": w(ks[2], ndf * 4, ndf * 2),
        "g3": jnp.ones((ndf * 4,), jnp.float32),
        "b3": jnp.zeros((ndf * 4,), jnp.float32),
        "w4": w(ks[3], ndf * 8, ndf * 4),
        "g4": jnp.ones((ndf * 8,), jnp.float32),
        "b4": jnp.zeros((ndf * 8,), jnp.float32),
        "w5": w(ks[4], 1, ndf * 8),
    }


if __name__ == "__main__":
    # DCGAN discriminator needs 64x64 spatial input to reach the final 1x1.
    B, NC, NDF = 2, 3, 8
    key = jax.random.PRNGKey(0)
    kx, kp = jax.random.split(key)
    x = jax.random.normal(kx, (B, NC, 64, 64), jnp.float32)
    params = init_params(kp, nc=NC, ndf=NDF)

    fwd = jax.jit(discriminator_forward)
    out = jax.block_until_ready(fwd(x, params))
    assert out.shape == (B, 1, 1, 1), out.shape
    assert bool(jnp.all((out >= 0.0) & (out <= 1.0)))  # sigmoid range
    print("KERNEL_OK")
</pallas_src>

<mosaic_0001>
module attributes {stable_mosaic.version = 11 : i64} {
  func.func @_conv_lrelu_kernel(%arg0: i32, %arg1: memref<8x48xbf16, #tpu.memory_space<vmem>>, %arg2: memref<48x512xbf16, #tpu.memory_space<vmem>>, %arg3: memref<8x512xbf16, #tpu.memory_space<vmem>>) attributes {dimension_semantics = [#tpu.dimension_semantics<parallel>], iteration_bounds = array<i64: 4>, scalar_prefetch = 0 : i64, scratch_operands = 0 : i64, tpu.core_type = #tpu.core_type<tc>, window_params = [{pipeline_mode = #tpu.pipeline_mode<synchronous>, transform_indices = @transform_0, window_bounds = array<i64: 8, 48>}, {transform_indices = @transform_1, window_bounds = array<i64: 48, 512>}, {transform_indices = @transform_2, window_bounds = array<i64: 8, 512>}]} {
    %c0 = arith.constant 0 : index
    %c0_0 = arith.constant 0 : index
    %0 = vector.load %arg1[%c0, %c0_0] : memref<8x48xbf16, #tpu.memory_space<vmem>>, vector<8x48xbf16>
    %c0_1 = arith.constant 0 : index
    %c0_2 = arith.constant 0 : index
    %1 = vector.load %arg2[%c0_1, %c0_2] : memref<48x512xbf16, #tpu.memory_space<vmem>>, vector<48x512xbf16>
    %cst = arith.constant dense<0.000000e+00> : vector<8x512xf32>
    %2 = tpu.matmul %0, %1, %cst {dimension_numbers = #tpu.dot_dimension_numbers<[1], [0], [0], [1], [0, 0, 1, 1], [], []>} : vector<8x48xbf16>, vector<48x512xbf16>, vector<8x512xf32> -> vector<8x512xf32>
    %cst_3 = arith.constant 0.000000e+00 : f32
    %3 = vector.broadcast %cst_3 : f32 to vector<8x512xf32>
    %4 = arith.cmpf oge, %2, %3 : vector<8x512xf32>
    %cst_4 = arith.constant 2.000000e-01 : f32
    %5 = vector.broadcast %cst_4 : f32 to vector<8x512xf32>
    %6 = arith.mulf %5, %2 : vector<8x512xf32>
    %7 = arith.select %4, %2, %6 : vector<8x512xi1>, vector<8x512xf32>
    %8 = arith.truncf %7 : vector<8x512xf32> to vector<8x512xbf16>
    %c0_5 = arith.constant 0 : index
    %c0_6 = arith.constant 0 : index
    %9 = vector.load %arg3[%c0_5, %c0_6] : memref<8x512xbf16, #tpu.memory_space<vmem>>, vector<8x512xbf16>
    tpu.vector_store %arg3[%c0_5, %c0_6], %8 {strides = array<i32>} : memref<8x512xbf16, #tpu.memory_space<vmem>>, vector<8x512xbf16>,
    return
  }
  func.func @transform_0(%arg0: i32) -> (i32, i32) {
    %c0_i32 = arith.constant 0 : i32
    %c0_i32_0 = arith.constant 0 : i32
    %c0_i32_1 = arith.constant 0 : i32
    return %c0_i32, %c0_i32_0 : i32, i32
  }
  func.func @transform_1(%arg0: i32) -> (i32, i32) {
    %c0_i32 = arith.constant 0 : i32
    %c0_i32_0 = arith.constant 0 : i32
    return %c0_i32, %arg0 : i32, i32
  }
  func.func @transform_2(%arg0: i32) -> (i32, i32) {
    %c0_i32 = arith.constant 0 : i32
    %c0_i32_0 = arith.constant 0 : i32
    return %c0_i32, %arg0 : i32, i32
  }
}

module attributes {stable_mosaic.version = 11 : i64} {
  func.func @_conv_bn_lrelu_kernel(%arg0: memref<16x128xbf16, #tpu.memory_space<vmem>>, %arg1: memref<128x512xbf16, #tpu.memory_space<vmem>>, %arg2: memref<16x1xf32, #tpu.memory_space<vmem>>, %arg3: memref<16x1xf32, #tpu.memory_space<vmem>>, %arg4: memref<16x512xbf16, #tpu.memory_space<vmem>>) attributes {dimension_semantics = [], scalar_prefetch = 0 : i64, scratch_operands = 0 : i64, tpu.core_type = #tpu.core_type<tc>} {
    %c0 = arith.constant 0 : index
    %c0_0 = arith.constant 0 : index
    %0 = vector.load %arg0[%c0, %c0_0] : memref<16x128xbf16, #tpu.memory_space<vmem>>, vector<16x128xbf16>
    %c0_1 = arith.constant 0 : index
    %c0_2 = arith.constant 0 : index
    %1 = vector.load %arg1[%c0_1, %c0_2] : memref<128x512xbf16, #tpu.memory_space<vmem>>, vector<128x512xbf16>
    %cst = arith.constant dense<0.000000e+00> : vector<16x512xf32>
    %2 = tpu.matmul %0, %1, %cst {dimension_numbers = #tpu.dot_dimension_numbers<[1], [0], [0], [1], [0, 0, 1, 1], [], []>} : vector<16x128xbf16>, vector<128x512xbf16>, vector<16x512xf32> -> vector<16x512xf32>
    %cst_3 = arith.constant dense<0.000000e+00> : vector<16xf32>
    %3 = vector.multi_reduction <add>, %2, %cst_3 [1] : vector<16x512xf32> to vector<16xf32>
    %4 = vector.shape_cast %3 : vector<16xf32> to vector<16x1xf32>
    %cst_4 = arith.constant 5.120000e+02 : f32
    %5 = vector.broadcast %cst_4 : f32 to vector<16x1xf32>
    %6 = arith.divf %4, %5 : vector<16x1xf32>
    %7 = vector.broadcast %6 : vector<16x1xf32> to vector<16x512xf32>
    %8 = arith.subf %2, %7 : vector<16x512xf32>
    %9 = arith.mulf %8, %8 : vector<16x512xf32>
    %cst_5 = arith.constant dense<0.000000e+00> : vector<16xf32>
    %10 = vector.multi_reduction <add>, %9, %cst_5 [1] : vector<16x512xf32> to vector<16xf32>
    %11 = vector.shape_cast %10 : vector<16xf32> to vector<16x1xf32>
    %cst_6 = arith.constant 5.120000e+02 : f32
    %12 = vector.broadcast %cst_6 : f32 to vector<16x1xf32>
    %13 = arith.divf %11, %12 : vector<16x1xf32>
    %14 = vector.broadcast %6 : vector<16x1xf32> to vector<16x512xf32>
    %15 = arith.subf %2, %14 : vector<16x512xf32>
    %cst_7 = arith.constant 9.99999974E-6 : f32
    %16 = vector.broadcast %cst_7 : f32 to vector<16x1xf32>
    %17 = arith.addf %13, %16 : vector<16x1xf32>
    %18 = math.rsqrt %17 : vector<16x1xf32>
    %19 = vector.broadcast %18 : vector<16x1xf32> to vector<16x512xf32>
    %20 = arith.mulf %15, %19 : vector<16x512xf32>
    %c0_8 = arith.constant 0 : index
    %c0_9 = arith.constant 0 : index
    %21 = vector.load %arg2[%c0_8, %c0_9] : memref<16x1xf32, #tpu.memory_space<vmem>>, vector<16x1xf32>
    %22 = vector.broadcast %21 : vector<16x1xf32> to vector<16x512xf32>
    %23 = arith.mulf %20, %22 : vector<16x512xf32>
    %c0_10 = arith.constant 0 : index
    %c0_11 = arith.constant 0 : index
    %24 = vector.load %arg3[%c0_10, %c0_11] : memref<16x1xf32, #tpu.memory_space<vmem>>, vector<16x1xf32>
    %25 = vector.broadcast %24 : vector<16x1xf32> to vector<16x512xf32>
    %26 = arith.addf %23, %25 : vector<16x512xf32>
    %cst_12 = arith.constant 0.000000e+00 : f32
    %27 = vector.broadcast %cst_12 : f32 to vector<16x512xf32>
    %28 = arith.cmpf oge, %26, %27 : vector<16x512xf32>
    %cst_13 = arith.constant 2.000000e-01 : f32
    %29 = vector.broadcast %cst_13 : f32 to vector<16x512xf32>
    %30 = arith.mulf %29, %26 : vector<16x512xf32>
    %31 = arith.select %28, %26, %30 : vector<16x512xi1>, vector<16x512xf32>
    %32 = arith.truncf %31 : vector<16x512xf32> to vector<16x512xbf16>
    %c0_14 = arith.constant 0 : index
    %c0_15 = arith.constant 0 : index
    %33 = vector.load %arg4[%c0_14, %c0_15] : memref<16x512xbf16, #tpu.memory_space<vmem>>, vector<16x512xbf16>
    tpu.vector_store %arg4[%c0_14, %c0_15], %32 {strides = array<i32>} : memref<16x512xbf16, #tpu.memory_space<vmem>>, vector<16x512xbf16>,
    return
  }
}

module attributes {stable_mosaic.version = 11 : i64} {
  func.func @_conv_bn_lrelu_kernel(%arg0: memref<32x256xbf16, #tpu.memory_space<vmem>>, %arg1: memref<256x128xbf16, #tpu.memory_space<vmem>>, %arg2: memref<32x1xf32, #tpu.memory_space<vmem>>, %arg3: memref<32x1xf32, #tpu.memory_space<vmem>>, %arg4: memref<32x128xbf16, #tpu.memory_space<vmem>>) attributes {dimension_semantics = [], scalar_prefetch = 0 : i64, scratch_operands = 0 : i64, tpu.core_type = #tpu.core_type<tc>} {
    %c0 = arith.constant 0 : index
    %c0_0 = arith.constant 0 : index
    %0 = vector.load %arg0[%c0, %c0_0] : memref<32x256xbf16, #tpu.memory_space<vmem>>, vector<32x256xbf16>
    %c0_1 = arith.constant 0 : index
    %c0_2 = arith.constant 0 : index
    %1 = vector.load %arg1[%c0_1, %c0_2] : memref<256x128xbf16, #tpu.memory_space<vmem>>, vector<256x128xbf16>
    %cst = arith.constant dense<0.000000e+00> : vector<32x128xf32>
    %2 = tpu.matmul %0, %1, %cst {dimension_numbers = #tpu.dot_dimension_numbers<[1], [0], [0], [1], [0, 0, 1, 1], [], []>} : vector<32x256xbf16>, vector<256x128xbf16>, vector<32x128xf32> -> vector<32x128xf32>
    %cst_3 = arith.constant dense<0.000000e+00> : vector<32xf32>
    %3 = vector.multi_reduction <add>, %2, %cst_3 [1] : vector<32x128xf32> to vector<32xf32>
    %4 = vector.shape_cast %3 : vector<32xf32> to vector<32x1xf32>
    %cst_4 = arith.constant 1.280000e+02 : f32
    %5 = vector.broadcast %cst_4 : f32 to vector<32x1xf32>
    %6 = arith.divf %4, %5 : vector<32x1xf32>
    %7 = vector.broadcast %6 : vector<32x1xf32> to vector<32x128xf32>
    %8 = arith.subf %2, %7 : vector<32x128xf32>
    %9 = arith.mulf %8, %8 : vector<32x128xf32>
    %cst_5 = arith.constant dense<0.000000e+00> : vector<32xf32>
    %10 = vector.multi_reduction <add>, %9, %cst_5 [1] : vector<32x128xf32> to vector<32xf32>
    %11 = vector.shape_cast %10 : vector<32xf32> to vector<32x1xf32>
    %cst_6 = arith.constant 1.280000e+02 : f32
    %12 = vector.broadcast %cst_6 : f32 to vector<32x1xf32>
    %13 = arith.divf %11, %12 : vector<32x1xf32>
    %14 = vector.broadcast %6 : vector<32x1xf32> to vector<32x128xf32>
    %15 = arith.subf %2, %14 : vector<32x128xf32>
    %cst_7 = arith.constant 9.99999974E-6 : f32
    %16 = vector.broadcast %cst_7 : f32 to vector<32x1xf32>
    %17 = arith.addf %13, %16 : vector<32x1xf32>
    %18 = math.rsqrt %17 : vector<32x1xf32>
    %19 = vector.broadcast %18 : vector<32x1xf32> to vector<32x128xf32>
    %20 = arith.mulf %15, %19 : vector<32x128xf32>
    %c0_8 = arith.constant 0 : index
    %c0_9 = arith.constant 0 : index
    %21 = vector.load %arg2[%c0_8, %c0_9] : memref<32x1xf32, #tpu.memory_space<vmem>>, vector<32x1xf32>
    %22 = vector.broadcast %21 : vector<32x1xf32> to vector<32x128xf32>
    %23 = arith.mulf %20, %22 : vector<32x128xf32>
    %c0_10 = arith.constant 0 : index
    %c0_11 = arith.constant 0 : index
    %24 = vector.load %arg3[%c0_10, %c0_11] : memref<32x1xf32, #tpu.memory_space<vmem>>, vector<32x1xf32>
    %25 = vector.broadcast %24 : vector<32x1xf32> to vector<32x128xf32>
    %26 = arith.addf %23, %25 : vector<32x128xf32>
    %cst_12 = arith.constant 0.000000e+00 : f32
    %27 = vector.broadcast %cst_12 : f32 to vector<32x128xf32>
    %28 = arith.cmpf oge, %26, %27 : vector<32x128xf32>
    %cst_13 = arith.constant 2.000000e-01 : f32
    %29 = vector.broadcast %cst_13 : f32 to vector<32x128xf32>
    %30 = arith.mulf %29, %26 : vector<32x128xf32>
    %31 = arith.select %28, %26, %30 : vector<32x128xi1>, vector<32x128xf32>
    %32 = arith.truncf %31 : vector<32x128xf32> to vector<32x128xbf16>
    %c0_14 = arith.constant 0 : index
    %c0_15 = arith.constant 0 : index
    %33 = vector.load %arg4[%c0_14, %c0_15] : memref<32x128xbf16, #tpu.memory_space<vmem>>, vector<32x128xbf16>
    tpu.vector_store %arg4[%c0_14, %c0_15], %32 {strides = array<i32>} : memref<32x128xbf16, #tpu.memory_space<vmem>>, vector<32x128xbf16>,
    return
  }
}

module attributes {stable_mosaic.version = 11 : i64} {
  func.func @_tail_kernel(%arg0: memref<64x512xbf16, #tpu.memory_space<vmem>>, %arg1: memref<512x32xbf16, #tpu.memory_space<vmem>>, %arg2: memref<64x1xf32, #tpu.memory_space<vmem>>, %arg3: memref<64x1xf32, #tpu.memory_space<vmem>>, %arg4: memref<64x32xf32, #tpu.memory_space<vmem>>, %arg5: memref<32x2xf32, #tpu.memory_space<vmem>>, %arg6: memref<1x2xf32, #tpu.memory_space<vmem>>) attributes {dimension_semantics = [], scalar_prefetch = 0 : i64, scratch_operands = 0 : i64, tpu.core_type = #tpu.core_type<tc>} {
    %c0 = arith.constant 0 : index
    %c0_0 = arith.constant 0 : index
    %0 = vector.load %arg0[%c0, %c0_0] : memref<64x512xbf16, #tpu.memory_space<vmem>>, vector<64x512xbf16>
    %c0_1 = arith.constant 0 : index
    %c0_2 = arith.constant 0 : index
    %1 = vector.load %arg1[%c0_1, %c0_2] : memref<512x32xbf16, #tpu.memory_space<vmem>>, vector<512x32xbf16>
    %cst = arith.constant dense<0.000000e+00> : vector<64x32xf32>
    %2 = tpu.matmul %0, %1, %cst {dimension_numbers = #tpu.dot_dimension_numbers<[1], [0], [0], [1], [0, 0, 1, 1], [], []>} : vector<64x512xbf16>, vector<512x32xbf16>, vector<64x32xf32> -> vector<64x32xf32>
    %cst_3 = arith.constant dense<0.000000e+00> : vector<64xf32>
    %3 = vector.multi_reduction <add>, %2, %cst_3 [1] : vector<64x32xf32> to vector<64xf32>
    %4 = vector.shape_cast %3 : vector<64xf32> to vector<64x1xf32>
    %cst_4 = arith.constant 3.200000e+01 : f32
    %5 = vector.broadcast %cst_4 : f32 to vector<64x1xf32>
    %6 = arith.divf %4, %5 : vector<64x1xf32>
    %7 = vector.broadcast %6 : vector<64x1xf32> to vector<64x32xf32>
    %8 = arith.subf %2, %7 : vector<64x32xf32>
    %9 = arith.mulf %8, %8 : vector<64x32xf32>
    %cst_5 = arith.constant dense<0.000000e+00> : vector<64xf32>
    %10 = vector.multi_reduction <add>, %9, %cst_5 [1] : vector<64x32xf32> to vector<64xf32>
    %11 = vector.shape_cast %10 : vector<64xf32> to vector<64x1xf32>
    %cst_6 = arith.constant 3.200000e+01 : f32
    %12 = vector.broadcast %cst_6 : f32 to vector<64x1xf32>
    %13 = arith.divf %11, %12 : vector<64x1xf32>
    %14 = vector.broadcast %6 : vector<64x1xf32> to vector<64x32xf32>
    %15 = arith.subf %2, %14 : vector<64x32xf32>
    %cst_7 = arith.constant 9.99999974E-6 : f32
    %16 = vector.broadcast %cst_7 : f32 to vector<64x1xf32>
    %17 = arith.addf %13, %16 : vector<64x1xf32>
    %18 = math.rsqrt %17 : vector<64x1xf32>
    %19 = vector.broadcast %18 : vector<64x1xf32> to vector<64x32xf32>
    %20 = arith.mulf %15, %19 : vector<64x32xf32>
    %c0_8 = arith.constant 0 : index
    %c0_9 = arith.constant 0 : index
    %21 = vector.load %arg2[%c0_8, %c0_9] : memref<64x1xf32, #tpu.memory_space<vmem>>, vector<64x1xf32>
    %22 = vector.broadcast %21 : vector<64x1xf32> to vector<64x32xf32>
    %23 = arith.mulf %20, %22 : vector<64x32xf32>
    %c0_10 = arith.constant 0 : index
    %c0_11 = arith.constant 0 : index
    %24 = vector.load %arg3[%c0_10, %c0_11] : memref<64x1xf32, #tpu.memory_space<vmem>>, vector<64x1xf32>
    %25 = vector.broadcast %24 : vector<64x1xf32> to vector<64x32xf32>
    %26 = arith.addf %23, %25 : vector<64x32xf32>
    %cst_12 = arith.constant 0.000000e+00 : f32
    %27 = vector.broadcast %cst_12 : f32 to vector<64x32xf32>
    %28 = arith.cmpf oge, %26, %27 : vector<64x32xf32>
    %cst_13 = arith.constant 2.000000e-01 : f32
    %29 = vector.broadcast %cst_13 : f32 to vector<64x32xf32>
    %30 = arith.mulf %29, %26 : vector<64x32xf32>
    %31 = arith.select %28, %26, %30 : vector<64x32xi1>, vector<64x32xf32>
    %c0_14 = arith.constant 0 : index
    %c0_15 = arith.constant 0 : index
    %32 = vector.load %arg4[%c0_14, %c0_15] : memref<64x32xf32, #tpu.memory_space<vmem>>, vector<64x32xf32>
    %33 = arith.mulf %31, %32 : vector<64x32xf32>
    %cst_16 = arith.constant dense<0.000000e+00> : vector<32xf32>
    %34 = vector.multi_reduction <add>, %33, %cst_16 [0] : vector<64x32xf32> to vector<32xf32>
    %35 = vector.shape_cast %34 : vector<32xf32> to vector<1x32xf32>
    %c0_17 = arith.constant 0 : index
    %c0_18 = arith.constant 0 : index
    %36 = vector.load %arg5[%c0_17, %c0_18] : memref<32x2xf32, #tpu.memory_space<vmem>>, vector<32x2xf32>
    %cst_19 = arith.constant dense<0.000000e+00> : vector<1x2xf32>
    %37 = tpu.matmul %35, %36, %cst_19 {dimension_numbers = #tpu.dot_dimension_numbers<[1], [0], [0], [1], [0, 0, 1, 1], [], []>} : vector<1x32xf32>, vector<32x2xf32>, vector<1x2xf32> -> vector<1x2xf32>
    %38 = arith.negf %37 : vector<1x2xf32>
    %39 = math.exp %38 : vector<1x2xf32>
    %cst_20 = arith.constant 1.000000e+00 : f32
    %40 = vector.broadcast %cst_20 : f32 to vector<1x2xf32>
    %41 = arith.addf %40, %39 : vector<1x2xf32>
    %42 = arith.divf %40, %41 : vector<1x2xf32>
    %c0_21 = arith.constant 0 : index
    %c0_22 = arith.constant 0 : index
    %43 = vector.load %arg6[%c0_21, %c0_22] : memref<1x2xf32, #tpu.memory_space<vmem>>, vector<1x2xf32>
    tpu.vector_store %arg6[%c0_21, %c0_22], %42 {strides = array<i32>} : memref<1x2xf32, #tpu.memory_space<vmem>>, vector<1x2xf32>,
    return
  }
}

</mosaic_0001>

<llo_original>
// kernel: discriminator_forward.4
$region0: #{discriminator_forward.4}
  #allocation0 [shape = 'u32[]', space=smem, size = 0x4, offset = 0x4, fixed_abs, tag = 'smem constant byte address 0x4 - core index']
  #allocation1 [shape = 'u32[72,128]{1,0:T(1,128)}', space=vmem, size = 0x9000, scoped, tag = 'internal scratch']
  %s0 = inlined_call_operand.vmem [shape: bf16[8,48], index: 0, kind: input, shape index: {}]
  %s1 = inlined_call_operand.vmem [shape: bf16[48,2048], index: 1, kind: input, shape index: {}]
  %s2 = inlined_call_operand.vmem [shape: bf16[8,2048], index: 2, kind: output, shape index: {}]
  %s3 = sld [smem:[#allocation0]]
  $region64: #{discriminator_forward.4} parent=0
    _
  %s5 = ssub.s32 1, %s3
  %s6 = scalar_select 0, %s5, %s3
  $region1: #{discriminator_forward.4} parent=0
    #allocation2 [shape = 'u8[98304]{0}', space=vmem, size = 0x18000, scoped, tag = 'input window, operand 1']
    loop: start=0, step=1, limit=6
    $region2: #{discriminator_forward.4} parent=1 // loop_pre_header
      _
    $region3: #{discriminator_forward.4} parent=1 // loop_header
      %s8 = sphi 0, %s12
      %p9 = scmp.ge.s32.totalorder %s8, 6
      %s16 = sphi 0, %s16
      %s18 = sphi 0, %s16
      %s19 = sphi 0, %s18
      %s33 = sphi 0, %s19
      %s39 = sphi 0, %s41
      %s42 = sphi 0, %s39
      %s43 = sphi 0, %s42
      %s59 = sphi 0, %s43
      %s65 = sphi 0, %s67
      %s68 = sphi 0, %s65
      %s69 = sphi 0, %s68
      %s85 = sphi 0, %s69
    $region4: #{discriminator_forward.4} parent=1 // loop_header_branch
      %11 = sbr.rel (%p9) target = $region8
    $region5: #{discriminator_forward.4} parent=1 // loop_body
      %s13 = ssub.s32 %s8, 1
      %s14 = ssub.s32 %s8, 2
      %s15 = sadd.s32 %s8, 1
      %s17 = sadd.s32 %s16, 1
      %p20 = scmp.eq.s32.totalorder %s8, 3
      %p21 = scmp.ne.s32.totalorder %s16, %s18
      %p22 = scmp.eq.s32.totalorder %s8, 0
      %p23 = por %p21, %p22
      %p24 = scmp.ne.s32.totalorder %s16, %s18
      %p25 = scmp.eq.s32.totalorder %s13, 3
      %p26 = por %p24, %p25
      %p27 = scmp.ne.s32.totalorder %s18, %s19
      %p28 = scmp.eq.s32.totalorder %s13, 0
      %p29 = por %p27, %p28
      %p30 = scmp.ne.s32.totalorder %s18, %s19
      %p31 = scmp.eq.s32.totalorder %s14, 3
      %p32 = por %p30, %p31
      %p34 = scmp.ne.s32.totalorder %s19, %s33
      %p35 = scmp.eq.s32.totalorder %s14, 0
      %p36 = por %p34, %p35
      %s37 = ssub.s32 %s8, %s15
      %p38 = scmp.eq.s32.totalorder %s37, 0
      %s40 = sadd.s32 %s39, 1
      %s41 = scalar_select %p38, %s39, %s40
      %p44 = pneg %p38
      %p45 = scmp.eq.s32.totalorder %s8, 3
      %p46 = por %p44, %p45
      %p47 = scmp.ne.s32.totalorder %s39, %s42
      %p48 = scmp.eq.s32.totalorder %s8, 0
      %p49 = por %p47, %p48
      %p50 = scmp.ne.s32.totalorder %s39, %s42
      %p51 = scmp.eq.s32.totalorder %s13, 3
      %p52 = por %p50, %p51
      %p53 = scmp.ne.s32.totalorder %s42, %s43
      %p54 = scmp.eq.s32.totalorder %s13, 0
      %p55 = por %p53, %p54
      %p56 = scmp.ne.s32.totalorder %s42, %s43
      %p57 = scmp.eq.s32.totalorder %s14, 3
      %p58 = por %p56, %p57
      %p60 = scmp.ne.s32.totalorder %s43, %s59
      %p61 = scmp.eq.s32.totalorder %s14, 0
      %p62 = por %p60, %p61
      %s63 = ssub.s32 %s8, %s15
      %p64 = scmp.eq.s32.totalorder %s63, 0
      %s66 = sadd.s32 %s65, 1
      %s67 = scalar_select %p64, %s65, %s66
      %p70 = pneg %p64
      %p71 = scmp.eq.s32.totalorder %s8, 3
      %p72 = por %p70, %p71
      %p73 = scmp.ne.s32.totalorder %s65, %s68
      %p74 = scmp.eq.s32.totalorder %s8, 0
      %p75 = por %p73, %p74
      %p76 = scmp.ne.s32.totalorder %s65, %s68
      %p77 = scmp.eq.s32.totalorder %s13, 3
      %p78 = por %p76, %p77
      %p79 = scmp.ne.s32.totalorder %s68, %s69
      %p80 = scmp.eq.s32.totalorder %s13, 0
      %p81 = por %p79, %p80
      %p82 = scmp.ne.s32.totalorder %s68, %s69
      %p83 = scmp.eq.s32.totalorder %s14, 3
      %p84 = por %p82, %p83
      %p86 = scmp.ne.s32.totalorder %s69, %s85
      %p87 = scmp.eq.s32.totalorder %s14, 0
      %p88 = por %p86, %p87
      %p89 = scmp.le.s32.totalorder 1, %s8
      %p90 = scmp.lt.s32.totalorder %s8, 5
      %p91 = pnand %p89, %p90
      %p92 = pneg %p91
      // Predicated region
      $region9: #{discriminator_forward.4} parent=5 // pred_check
        _
      $region10: #{discriminator_forward.4} parent=5 // pred_check_branch
        %94 = sbr.rel (%p91) target = $region12
      $region11: #{discriminator_forward.4} parent=5 // pred_region
        %s95 = ssub.s32 %s8, 1
        // Predicated region
        $region13: #{discriminator_forward.4} parent=11 // pred_check
          %p96 = pneg %p29
        $region14: #{discriminator_forward.4} parent=11 // pred_check_branch
          %98 = sbr.rel (%p96) target = $region16
        $region15: #{discriminator_forward.4} parent=11 // pred_region
          _
        $region16: #{discriminator_forward.4} parent=11 // pred_fallthru
          _
      $region12: #{discriminator_forward.4} parent=5 // pred_fallthru
        _
      %p99 = scmp.lt.s32.totalorder %s8, 4
      // Predicated region
      $region17: #{discriminator_forward.4} parent=5 // pred_check
        %p100 = pneg %p99
      $region18: #{discriminator_forward.4} parent=5 // pred_check_branch
        %102 = sbr.rel (%p100) target = $region20
      $region19: #{discriminator_forward.4} parent=5 // pred_region
        // Predicated region
        $region21: #{discriminator_forward.4} parent=19 // pred_check
          %p103 = pneg %p49
        $region22: #{discriminator_forward.4} parent=19 // pred_check_branch
          %105 = sbr.rel (%p103) target = $region24
        $region23: #{discriminator_forward.4} parent=19 // pred_region
          %s106 = sand.u32 %s39, 1
          %s107 = sand.u32 %s39, 1
          %s108 = smul.addr %s107, 96
          %s109 = scalar_lea.vmem [#allocation2], %s108
          %s110 = smul.u32 4, %s8
          %s111 = smul.addr %s110, 4
          %s112 = scalar_lea.vmem %s1, %s111
          // Predicated region
          $region25: #{discriminator_forward.4} parent=23 // pred_check
            _
          $region26: #{discriminator_forward.4} parent=23 // pred_check_branch
            %114 = sbr.rel (0) target = $region28
          $region27: #{discriminator_forward.4} parent=23 // pred_region
            // Predicated region
            $region29: #{discriminator_forward.4} parent=27 // pred_check
              _
            $region30: #{discriminator_forward.4} parent=27 // pred_check_branch
              %116 = sbr.rel (0) target = $region32
            $region31: #{discriminator_forward.4} parent=27 // pred_region
              loop: start=0, step=1, limit=1
              $region33: #{discriminator_forward.4} parent=31 // loop_pre_header
                _
              $region34: #{discriminator_forward.4} parent=31 // loop_header
                %s118 = sphi 0, %s122
                %p119 = scmp.ge.s32.totalorder %s118, 1
                %s123 = sphi %s112, %s112
                %s124 = sphi %s109, %s109
              $region35: #{discriminator_forward.4} parent=31 // loop_header_branch
                %121 = sbr.rel (%p119) target = $region39
              $region36: #{discriminator_forward.4} parent=31 // loop_body
                %v125 = vld [vmem:[%s123] sm:$0xff]
                %126 = vst [vmem:[%s124] sm:$0xff] %v125
                %v127 = vld [vmem:[%s123 + $0x8] sm:$0xff]
                %128 = vst [vmem:[%s124 + $0x8] sm:$0xff] %v127
                %v129 = vld [vmem:[%s123 + $0x40] sm:$0xff]
                %130 = vst [vmem:[%s124 + $0x10] sm:$0xff] %v129
                %v131 = vld [vmem:[%s123 + $0x48] sm:$0xff]
                %132 = vst [vmem:[%s124 + $0x18] sm:$0xff] %v131
                %v133 = vld [vmem:[%s123 + $0x80] sm:$0xff]
                %134 = vst [vmem:[%s124 + $0x20] sm:$0xff] %v133
                %v135 = vld [vmem:[%s123 + $0x88] sm:$0xff]
                %136 = vst [vmem:[%s124 + $0x28] sm:$0xff] %v135
                %v137 = vld [vmem:[%s123 + $0xc0] sm:$0xff]
                %138 = vst [vmem:[%s124 + $0x30] sm:$0xff] %v137
                %v139 = vld [vmem:[%s123 + $0xc8] sm:$0xff]
                %140 = vst [vmem:[%s124 + $0x38] sm:$0xff] %v139
                %v141 = vld [vmem:[%s123 + $0x100] sm:$0xff]
                %142 = vst [vmem:[%s124 + $0x40] sm:$0xff] %v141
                %v143 = vld [vmem:[%s123 + $0x108] sm:$0xff]
                %144 = vst [vmem:[%s124 + $0x48] sm:$0xff] %v143
                %v145 = vld [vmem:[%s123 + $0x140] sm:$0xff]
                %146 = vst [vmem:[%s124 + $0x50] sm:$0xff] %v145
                %v147 = vld [vmem:[%s123 + $0x148] sm:$0xff]
                %148 = vst [vmem:[%s124 + $0x58] sm:$0xff] %v147
              $region37: #{discriminator_forward.4} parent=31 // loop_footer
                %s122 = sadd.s32 1, %s118
              $region38: #{discriminator_forward.4} parent=31 // loop_footer_branch
                %117 = sbr.rel target = $region34
              $region39: #{discriminator_forward.4} parent=31 // loop_exit
                _
            $region32: #{discriminator_forward.4} parent=27 // pred_fallthru
              _
            // Predicated region
            $region40: #{discriminator_forward.4} parent=27 // pred_check
              _
            $region41: #{discriminator_forward.4} parent=27 // pred_check_branch
              %150 = sbr.rel target = $region43
            $region42: #{discriminator_forward.4} parent=27 // pred_region
              _
            $region43: #{discriminator_forward.4} parent=27 // pred_fallthru
              _
          $region28: #{discriminator_forward.4} parent=23 // pred_fallthru
            _
          %151 = vnop
        $region24: #{discriminator_forward.4} parent=19 // pred_fallthru
          _
      $region20: #{discriminator_forward.4} parent=5 // pred_fallthru
        _
      %p152 = scmp.le.s32.totalorder 1, %s8
      %p153 = scmp.lt.s32.totalorder %s8, 5
      %p154 = pnand %p152, %p153
      %p155 = pneg %p154
      // Predicated region
      $region44: #{discriminator_forward.4} parent=5 // pred_check
        _
      $region45: #{discriminator_forward.4} parent=5 // pred_check_branch
        %157 = sbr.rel (%p154) target = $region47
      $region46: #{discriminator_forward.4} parent=5 // pred_region
        %s158 = ssub.s32 %s8, 1
        %s159 = sand.u32 %s42, 1
        %s160 = sand.u32 %s42, 1
        %s161 = smul.addr %s160, 96
        %s162 = scalar_lea.vmem [#allocation2], %s161
        // Predicated region
        $region48: #{discriminator_forward.4} parent=46 // pred_check
          %p163 = pneg %p55
        $region49: #{discriminator_forward.4} parent=46 // pred_check_branch
          %165 = sbr.rel (%p163) target = $region51
        $region50: #{discriminator_forward.4} parent=46 // pred_region
          _
        $region51: #{discriminator_forward.4} parent=46 // pred_fallthru
          _
        %p166 = pneg %p29
        %p167 = pneg %p26
        %s168 = sand.u32 %s42, 1
        %s169 = sand.u32 %s42, 1
        %s170 = smul.addr %s169, 96
        %s171 = scalar_lea.vmem [#allocation2], %s170
        %p172 = pneg %p55
        %p173 = pneg %p52
        %p174 = pneg %p81
        %p175 = pneg %p78
        %s176 = smul.u32 4, %s13
        %p177 = scmp.lt.s32.totalorder %s176, 15
        %s178 = scalar_select %p177, %s176, 15
        %s179 = smul.addr %s178, 4
        %s180 = scalar_lea.vmem %s2, %s179
        %s181 = smul.u32 4, %s13
        %s182 = smul.u32 4, %s13
        %p183 = scmp.lt.s32.totalorder %s182, 15
        %s184 = scalar_select %p183, %s182, 15
        %s185 = smul.addr %s184, 4
        %s186 = scalar_lea.vmem %s2, %s185
        %s187 = smul.u32 4, %s13
        %v189 = vld [vmem:[%s0] sm:$0xf]
        %v190 = vld [vmem:[%s162] sm:$0xff]
        %v191 = vld [vmem:[%s162 + $0x8] sm:$0xff]
        %v192 = vld [vmem:[%s162 + $0x10] sm:$0xff]
        %v193 = vld [vmem:[%s162 + $0x18] sm:$0xff]
        %v194 = vld [vmem:[%s162 + $0x20] sm:$0xff]
        %v195 = vld [vmem:[%s162 + $0x28] sm:$0xff]
        %v196 = vld [vmem:[%s162 + $0x30] sm:$0xff]
        %v197 = vld [vmem:[%s162 + $0x38] sm:$0xff]
        %v198 = vld [vmem:[%s162 + $0x40] sm:$0xff]
        %v199 = vld [vmem:[%s162 + $0x48] sm:$0xff]
        %v200 = vld [vmem:[%s162 + $0x50] sm:$0xff]
        %v201 = vld [vmem:[%s162 + $0x58] sm:$0xff]
        %v214 = vunpack.c.l.b16 %v190
        %v215 = vunpack.c.h.b16 %v190
        %v216 = vunpack.c.l.b16 %v191
        %v217 = vunpack.c.h.b16 %v191
        %v218 = vunpack.c.l.b16 %v192
        %v219 = vunpack.c.h.b16 %v192
        %v220 = vunpack.c.l.b16 %v193
        %v221 = vunpack.c.h.b16 %v193
        %v222 = vunpack.c.l.b16 %v194
        %v223 = vunpack.c.h.b16 %v194
        %v224 = vunpack.c.l.b16 %v195
        %v225 = vunpack.c.h.b16 %v195
        %v226 = vunpack.c.l.b16 %v196
        %v227 = vunpack.c.h.b16 %v196
        %v228 = vunpack.c.l.b16 %v197
        %v229 = vunpack.c.h.b16 %v197
        %v230 = vunpack.c.l.b16 %v198
        %v231 = vunpack.c.h.b16 %v198
        %v232 = vunpack.c.l.b16 %v199
        %v233 = vunpack.c.h.b16 %v199
        %v234 = vunpack.c.l.b16 %v200
        %v235 = vunpack.c.h.b16 %v200
        %v236 = vunpack.c.l.b16 %v201
        %v237 = vunpack.c.h.b16 %v201
        %v238 = vpack.c.b16 %v218, %v214
        %v239 = vpack.c.b16 %v219, %v215
        %v240 = vpack.c.b16 %v220, %v216
        %v241 = vpack.c.b16 %v221, %v217
        %v242 = vpack.c.b16 %v226, %v222
        %v243 = vpack.c.b16 %v227, %v223
        %v244 = vpack.c.b16 %v228, %v224
        %v245 = vpack.c.b16 %v229, %v225
        %v246 = vpack.c.b16 %v234, %v230
        %v247 = vpack.c.b16 %v235, %v231
        %v248 = vpack.c.b16 %v236, %v232
        %v249 = vpack.c.b16 %v237, %v233
        %vm262 = vcmask 392192
        %v264 = vsel %vm262, %v189, 0
        %266 = vmatpush.bf16.msra.mxu0 0
        %267 = vmatpush.bf16.msra.mxu0 0
        %268 = vmatpush.bf16.msra.mxu0 0
        %269 = vmatpush.bf16.msra.mxu0 0
        %270 = vmatpush.bf16.msra.mxu0 0
        %271 = vmatpush.bf16.msra.mxu0 %v246
        %272 = vmatpush.bf16.msra.mxu0 %v242
        %273 = vmatpush.bf16.msra.mxu0 %v238
        %274 = vmatmul.bf16.gmra.mxu0 %v264
        %v275 = vpop.f32.mrf.mxu0
        %v276 = vadd.f32 0.0, %v275
        %v277 = vpop.f32.mrf.mxu0
        %278 = vdwg.mxu0
        %279 = vmatpush.bf16.msra.mxu0 0
        %280 = vmatpush.bf16.msra.mxu0 0
        %281 = vmatpush.bf16.msra.mxu0 0
        %282 = vmatpush.bf16.msra.mxu0 0
        %283 = vmatpush.bf16.msra.mxu0 0
        %284 = vmatpush.bf16.msra.mxu0 %v247
        %285 = vmatpush.bf16.msra.mxu0 %v243
        %286 = vmatpush.bf16.msra.mxu0 %v239
        %287 = vmatmul.bf16.gmra.mxu0 %v264
        %v288 = vpop.f32.mrf.mxu0
        %v289 = vadd.f32 0.0, %v288
        %v290 = vpop.f32.mrf.mxu0
        %291 = vdwg.mxu0
        %292 = vmatpush.bf16.msra.mxu0 0
        %293 = vmatpush.bf16.msra.mxu0 0
        %294 = vmatpush.bf16.msra.mxu0 0
        %295 = vmatpush.bf16.msra.mxu0 0
        %296 = vmatpush.bf16.msra.mxu0 0
        %297 = vmatpush.bf16.msra.mxu0 %v248
        %298 = vmatpush.bf16.msra.mxu0 %v244
        %299 = vmatpush.bf16.msra.mxu0 %v240
        %300 = vmatmul.bf16.gmra.mxu0 %v264
        %v301 = vpop.f32.mrf.mxu0
        %v302 = vadd.f32 0.0, %v301
        %v303 = vpop.f32.mrf.mxu0
        %304 = vdwg.mxu0
        %305 = vmatpush.bf16.msra.mxu0 0
        %306 = vmatpush.bf16.msra.mxu0 0
        %307 = vmatpush.bf16.msra.mxu0 0
        %308 = vmatpush.bf16.msra.mxu0 0
        %309 = vmatpush.bf16.msra.mxu0 0
        %310 = vmatpush.bf16.msra.mxu0 %v249
        %311 = vmatpush.bf16.msra.mxu0 %v245
        %312 = vmatpush.bf16.msra.mxu0 %v241
        %313 = vmatmul.bf16.gmra.mxu0 %v264
        %v314 = vpop.f32.mrf.mxu0
        %v315 = vadd.f32 0.0, %v314
        %v316 = vpop.f32.mrf.mxu0
        %317 = vdwg.mxu0
        %vm318 = vcmp.ge.f32.partialorder %v276, 0.0
        %vm319 = vcmp.ge.f32.partialorder %v289, 0.0
        %vm320 = vcmp.ge.f32.partialorder %v302, 0.0
        %vm321 = vcmp.ge.f32.partialorder %v315, 0.0
        %v322 = vmul.f32 %v276, 0.2
        %v323 = vmul.f32 %v289, 0.2
        %v324 = vmul.f32 %v302, 0.2
        %v325 = vmul.f32 %v315, 0.2
        %v326 = vsel %vm318, %v276, %v322
        %v327 = vsel %vm319, %v289, %v323
        %v328 = vsel %vm320, %v302, %v324
        %v329 = vsel %vm321, %v315, %v325
        %v330 = vpack.c.bf16 %v327, %v326
        %v331 = vpack.c.bf16 %v329, %v328
        %332 = vst [vmem:[%s186] sm:$0xff] %v330
        %333 = vst [vmem:[%s186 + $0x8] sm:$0xff] %v331
        %s334 = smul.u32 4, %s13
        %p335 = scmp.lt.s32.totalorder %s334, 15
        %s336 = scalar_select %p335, %s334, 15
        %s337 = smul.addr %s336, 4
        %s338 = scalar_lea.vmem %s2, %s337
        // Predicated region
        $region52: #{discriminator_forward.4} parent=46 // pred_check
          %p339 = pneg %p78
        $region53: #{discriminator_forward.4} parent=46 // pred_check_branch
          %341 = sbr.rel (%p339) target = $region55
        $region54: #{discriminator_forward.4} parent=46 // pred_region
          %s342 = smul.u32 4, %s13
        $region55: #{discriminator_forward.4} parent=46 // pred_fallthru
          _
      $region47: #{discriminator_forward.4} parent=5 // pred_fallthru
        _
      %p343 = scmp.le.s32.totalorder 2, %s8
      // Predicated region
      $region56: #{discriminator_forward.4} parent=5 // pred_check
        %p344 = pneg %p343
      $region57: #{discriminator_forward.4} parent=5 // pred_check_branch
        %346 = sbr.rel (%p344) target = $region59
      $region58: #{discriminator_forward.4} parent=5 // pred_region
        %s347 = ssub.s32 %s8, 2
        // Predicated region
        $region60: #{discriminator_forward.4} parent=58 // pred_check
          %p348 = pneg %p84
        $region61: #{discriminator_forward.4} parent=58 // pred_check_branch
          %350 = sbr.rel (%p348) target = $region63
        $region62: #{discriminator_forward.4} parent=58 // pred_region
          %s351 = smul.u32 4, %s14
          %p352 = scmp.lt.s32.totalorder %s351, 15
          %s353 = scalar_select %p352, %s351, 15
          %s354 = smul.addr %s353, 4
          %s355 = scalar_lea.vmem %s2, %s354
        $region63: #{discriminator_forward.4} parent=58 // pred_fallthru
          _
      $region59: #{discriminator_forward.4} parent=5 // pred_fallthru
        _
    $region6: #{discriminator_forward.4} parent=1 // loop_footer
      %s12 = sadd.s32 1, %s8
    $region7: #{discriminator_forward.4} parent=1 // loop_footer_branch
      %7 = sbr.rel target = $region3
    $region8: #{discriminator_forward.4} parent=1 // loop_exit
      _

// kernel: discriminator_forward.5
$region0: #{discriminator_forward.5}
  #allocation0 [shape = 'u32[]', space=smem, size = 0x4, offset = 0x4, fixed_abs, tag = 'smem constant byte address 0x4 - core index']
  #allocation1 [shape = 'u32[72,128]{1,0:T(1,128)}', space=vmem, size = 0x9000, scoped, tag = 'internal scratch']
  %s0 = inlined_call_operand.vmem [shape: bf16[16,128], index: 0, kind: input, shape index: {}]
  %s1 = inlined_call_operand.vmem [shape: bf16[128,512], index: 1, kind: input, shape index: {}]
  %s2 = inlined_call_operand.vmem [shape: f32[16,1], index: 2, kind: input, shape index: {}]
  %s3 = inlined_call_operand.vmem [shape: f32[16,1], index: 3, kind: input, shape index: {}]
  %s4 = inlined_call_operand.vmem [shape: bf16[16,512], index: 4, kind: output, shape index: {}]
  %s5 = sld [smem:[#allocation0]]
  $region26: #{discriminator_forward.5} parent=0
    _
  %s7 = ssub.s32 1, %s5
  %s8 = scalar_select 0, %s7, %s5
  // Predicated region
  $region2: #{discriminator_forward.5} parent=0 // pred_check
    _
  $region3: #{discriminator_forward.5} parent=0 // pred_check_branch
    %10 = sbr.rel (0) target = $region5
  $region4: #{discriminator_forward.5} parent=0 // pred_region
    _
  $region5: #{discriminator_forward.5} parent=0 // pred_fallthru
    _
  // Predicated region
  $region6: #{discriminator_forward.5} parent=0 // pred_check
    _
  $region7: #{discriminator_forward.5} parent=0 // pred_check_branch
    %12 = sbr.rel (0) target = $region9
  $region8: #{discriminator_forward.5} parent=0 // pred_region
    _
  $region9: #{discriminator_forward.5} parent=0 // pred_fallthru
    _
  // Predicated region
  $region10: #{discriminator_forward.5} parent=0 // pred_check
    _
  $region11: #{discriminator_forward.5} parent=0 // pred_check_branch
    %14 = sbr.rel (0) target = $region13
  $region12: #{discriminator_forward.5} parent=0 // pred_region
    _
  $region13: #{discriminator_forward.5} parent=0 // pred_fallthru
    _
  // Predicated region
  $region14: #{discriminator_forward.5} parent=0 // pred_check
    _
  $region15: #{discriminator_forward.5} parent=0 // pred_check_branch
    %16 = sbr.rel (0) target = $region17
  $region16: #{discriminator_forward.5} parent=0 // pred_region
    _
  $region17: #{discriminator_forward.5} parent=0 // pred_fallthru
    _
  %v17 = vld [vmem:[%s0] sm:$0xf]
  %v18 = vld [vmem:[%s0 + $0x4] sm:$0xf]
  %v19 = vld [vmem:[%s1] sm:$0xff]
  %v20 = vld [vmem:[%s1 + $0x8] sm:$0xff]
  %v21 = vld [vmem:[%s1 + $0x10] sm:$0xff]
  %v22 = vld [vmem:[%s1 + $0x18] sm:$0xff]
  %v23 = vld [vmem:[%s1 + $0x20] sm:$0xff]
  %v24 = vld [vmem:[%s1 + $0x28] sm:$0xff]
  %v25 = vld [vmem:[%s1 + $0x30] sm:$0xff]
  %v26 = vld [vmem:[%s1 + $0x38] sm:$0xff]
  %v27 = vld [vmem:[%s1 + $0x40] sm:$0xff]
  %v28 = vld [vmem:[%s1 + $0x48] sm:$0xff]
  %v29 = vld [vmem:[%s1 + $0x50] sm:$0xff]
  %v30 = vld [vmem:[%s1 + $0x58] sm:$0xff]
  %v31 = vld [vmem:[%s1 + $0x60] sm:$0xff]
  %v32 = vld [vmem:[%s1 + $0x68] sm:$0xff]
  %v33 = vld [vmem:[%s1 + $0x70] sm:$0xff]
  %v34 = vld [vmem:[%s1 + $0x78] sm:$0xff]
  %v35 = vld [vmem:[%s1 + $0x80] sm:$0xff]
  %v36 = vld [vmem:[%s1 + $0x88] sm:$0xff]
  %v37 = vld [vmem:[%s1 + $0x90] sm:$0xff]
  %v38 = vld [vmem:[%s1 + $0x98] sm:$0xff]
  %v39 = vld [vmem:[%s1 + $0xa0] sm:$0xff]
  %v40 = vld [vmem:[%s1 + $0xa8] sm:$0xff]
  %v41 = vld [vmem:[%s1 + $0xb0] sm:$0xff]
  %v42 = vld [vmem:[%s1 + $0xb8] sm:$0xff]
  %v43 = vld [vmem:[%s1 + $0xc0] sm:$0xff]
  %v44 = vld [vmem:[%s1 + $0xc8] sm:$0xff]
  %v45 = vld [vmem:[%s1 + $0xd0] sm:$0xff]
  %v46 = vld [vmem:[%s1 + $0xd8] sm:$0xff]
  %v47 = vld [vmem:[%s1 + $0xe0] sm:$0xff]
  %v48 = vld [vmem:[%s1 + $0xe8] sm:$0xff]
  %v49 = vld [vmem:[%s1 + $0xf0] sm:$0xff]
  %v50 = vld [vmem:[%s1 + $0xf8] sm:$0xff]
  %v53 = vunpack.c.l.b16 %v17
  %v54 = vunpack.c.l.b16 %v18
  %v55 = vpack.c.b16 %v54, %v53
  %v89 = vunpack.c.l.b16 %v19
  %v90 = vunpack.c.h.b16 %v19
  %v91 = vunpack.c.l.b16 %v20
  %v92 = vunpack.c.h.b16 %v20
  %v93 = vunpack.c.l.b16 %v21
  %v94 = vunpack.c.h.b16 %v21
  %v95 = vunpack.c.l.b16 %v22
  %v96 = vunpack.c.h.b16 %v22
  %v97 = vunpack.c.l.b16 %v23
  %v98 = vunpack.c.h.b16 %v23
  %v99 = vunpack.c.l.b16 %v24
  %v100 = vunpack.c.h.b16 %v24
  %v101 = vunpack.c.l.b16 %v25
  %v102 = vunpack.c.h.b16 %v25
  %v103 = vunpack.c.l.b16 %v26
  %v104 = vunpack.c.h.b16 %v26
  %v105 = vunpack.c.l.b16 %v27
  %v106 = vunpack.c.h.b16 %v27
  %v107 = vunpack.c.l.b16 %v28
  %v108 = vunpack.c.h.b16 %v28
  %v109 = vunpack.c.l.b16 %v29
  %v110 = vunpack.c.h.b16 %v29
  %v111 = vunpack.c.l.b16 %v30
  %v112 = vunpack.c.h.b16 %v30
  %v113 = vunpack.c.l.b16 %v31
  %v114 = vunpack.c.h.b16 %v31
  %v115 = vunpack.c.l.b16 %v32
  %v116 = vunpack.c.h.b16 %v32
  %v117 = vunpack.c.l.b16 %v33
  %v118 = vunpack.c.h.b16 %v33
  %v119 = vunpack.c.l.b16 %v34
  %v120 = vunpack.c.h.b16 %v34
  %v121 = vunpack.c.l.b16 %v35
  %v122 = vunpack.c.h.b16 %v35
  %v123 = vunpack.c.l.b16 %v36
  %v124 = vunpack.c.h.b16 %v36
  %v125 = vunpack.c.l.b16 %v37
  %v126 = vunpack.c.h.b16 %v37
  %v127 = vunpack.c.l.b16 %v38
  %v128 = vunpack.c.h.b16 %v38
  %v129 = vunpack.c.l.b16 %v39
  %v130 = vunpack.c.h.b16 %v39
  %v131 = vunpack.c.l.b16 %v40
  %v132 = vunpack.c.h.b16 %v40
  %v133 = vunpack.c.l.b16 %v41
  %v134 = vunpack.c.h.b16 %v41
  %v135 = vunpack.c.l.b16 %v42
  %v136 = vunpack.c.h.b16 %v42
  %v137 = vunpack.c.l.b16 %v43
  %v138 = vunpack.c.h.b16 %v43
  %v139 = vunpack.c.l.b16 %v44
  %v140 = vunpack.c.h.b16 %v44
  %v141 = vunpack.c.l.b16 %v45
  %v142 = vunpack.c.h.b16 %v45
  %v143 = vunpack.c.l.b16 %v46
  %v144 = vunpack.c.h.b16 %v46
  %v145 = vunpack.c.l.b16 %v47
  %v146 = vunpack.c.h.b16 %v47
  %v147 = vunpack.c.l.b16 %v48
  %v148 = vunpack.c.h.b16 %v48
  %v149 = vunpack.c.l.b16 %v49
  %v150 = vunpack.c.h.b16 %v49
  %v151 = vunpack.c.l.b16 %v50
  %v152 = vunpack.c.h.b16 %v50
  %v153 = vpack.c.b16 %v93, %v89
  %v154 = vpack.c.b16 %v94, %v90
  %v155 = vpack.c.b16 %v95, %v91
  %v156 = vpack.c.b16 %v96, %v92
  %v157 = vpack.c.b16 %v101, %v97
  %v158 = vpack.c.b16 %v102, %v98
  %v159 = vpack.c.b16 %v103, %v99
  %v160 = vpack.c.b16 %v104, %v100
  %v161 = vpack.c.b16 %v109, %v105
  %v162 = vpack.c.b16 %v110, %v106
  %v163 = vpack.c.b16 %v111, %v107
  %v164 = vpack.c.b16 %v112, %v108
  %v165 = vpack.c.b16 %v117, %v113
  %v166 = vpack.c.b16 %v118, %v114
  %v167 = vpack.c.b16 %v119, %v115
  %v168 = vpack.c.b16 %v120, %v116
  %v169 = vpack.c.b16 %v125, %v121
  %v170 = vpack.c.b16 %v126, %v122
  %v171 = vpack.c.b16 %v127, %v123
  %v172 = vpack.c.b16 %v128, %v124
  %v173 = vpack.c.b16 %v133, %v129
  %v174 = vpack.c.b16 %v134, %v130
  %v175 = vpack.c.b16 %v135, %v131
  %v176 = vpack.c.b16 %v136, %v132
  %v177 = vpack.c.b16 %v141, %v137
  %v178 = vpack.c.b16 %v142, %v138
  %v179 = vpack.c.b16 %v143, %v139
  %v180 = vpack.c.b16 %v144, %v140
  %v181 = vpack.c.b16 %v149, %v145
  %v182 = vpack.c.b16 %v150, %v146
  %v183 = vpack.c.b16 %v151, %v147
  %v184 = vpack.c.b16 %v152, %v148
  %217 = vmatpush.bf16.msra.mxu0 %v181
  %218 = vmatpush.bf16.msra.mxu0 %v177
  %219 = vmatpush.bf16.msra.mxu0 %v173
  %220 = vmatpush.bf16.msra.mxu0 %v169
  %221 = vmatpush.bf16.msra.mxu0 %v165
  %222 = vmatpush.bf16.msra.mxu0 %v161
  %223 = vmatpush.bf16.msra.mxu0 %v157
  %224 = vmatpush.bf16.msra.mxu0 %v153
  %225 = vmatmul.bf16.gmra.mxu0 %v55
  %v226 = vpop.f32.mrf.mxu0
  %v227 = vadd.f32 0.0, %v226
  %v228 = vpop.f32.mrf.mxu0
  %v229 = vadd.f32 0.0, %v228
  %230 = vdwg.mxu0
  %231 = vmatpush.bf16.msra.mxu0 %v182
  %232 = vmatpush.bf16.msra.mxu0 %v178
  %233 = vmatpush.bf16.msra.mxu0 %v174
  %234 = vmatpush.bf16.msra.mxu0 %v170
  %235 = vmatpush.bf16.msra.mxu0 %v166
  %236 = vmatpush.bf16.msra.mxu0 %v162
  %237 = vmatpush.bf16.msra.mxu0 %v158
  %238 = vmatpush.bf16.msra.mxu0 %v154
  %239 = vmatmul.bf16.gmra.mxu0 %v55
  %v240 = vpop.f32.mrf.mxu0
  %v241 = vadd.f32 0.0, %v240
  %v242 = vpop.f32.mrf.mxu0
  %v243 = vadd.f32 0.0, %v242
  %244 = vdwg.mxu0
  %245 = vmatpush.bf16.msra.mxu0 %v183
  %246 = vmatpush.bf16.msra.mxu0 %v179
  %247 = vmatpush.bf16.msra.mxu0 %v175
  %248 = vmatpush.bf16.msra.mxu0 %v171
  %249 = vmatpush.bf16.msra.mxu0 %v167
  %250 = vmatpush.bf16.msra.mxu0 %v163
  %251 = vmatpush.bf16.msra.mxu0 %v159
  %252 = vmatpush.bf16.msra.mxu0 %v155
  %253 = vmatmul.bf16.gmra.mxu0 %v55
  %v254 = vpop.f32.mrf.mxu0
  %v255 = vadd.f32 0.0, %v254
  %v256 = vpop.f32.mrf.mxu0
  %v257 = vadd.f32 0.0, %v256
  %258 = vdwg.mxu0
  %259 = vmatpush.bf16.msra.mxu0 %v184
  %260 = vmatpush.bf16.msra.mxu0 %v180
  %261 = vmatpush.bf16.msra.mxu0 %v176
  %262 = vmatpush.bf16.msra.mxu0 %v172
  %263 = vmatpush.bf16.msra.mxu0 %v168
  %264 = vmatpush.bf16.msra.mxu0 %v164
  %265 = vmatpush.bf16.msra.mxu0 %v160
  %266 = vmatpush.bf16.msra.mxu0 %v156
  %267 = vmatmul.bf16.gmra.mxu0 %v55
  %v268 = vpop.f32.mrf.mxu0
  %v269 = vadd.f32 0.0, %v268
  %v270 = vpop.f32.mrf.mxu0
  %v271 = vadd.f32 0.0, %v270
  %272 = vdwg.mxu0
  %v273 = vadd.f32 %v227, %v241
  %v274 = vadd.f32 %v273, %v255
  %v275 = vadd.f32 %v274, %v269
  %276 = vadd.xlane.f32.xlu0 %v275
  %v277 = vpop.xlane.xlu0 %276
  %v278 = vadd.f32 %v229, %v243
  %v279 = vadd.f32 %v278, %v257
  %v280 = vadd.f32 %v279, %v271
  %281 = vadd.xlane.f32.xlu0 %v280
  %v282 = vpop.xlane.xlu0 %281
  %v283 = vrcp.pop 512.0
  %v284 = vmul.f32 512.0, %v283
  %v285 = vsub.f32 1.0, %v284
  %v286 = vmul.f32 %v283, %v285
  %v287 = vadd.f32 %v283, %v286
  %vm288 = vweird.f32 %v283
  %v289 = vsel %vm288, %v283, %v287
  %v290 = vmul.f32 %v277, %v289
  %v291 = vmul.f32 %v282, %v289
  %v292 = vsub.f32 %v227, %v290
  %v293 = vsub.f32 %v241, %v290
  %v294 = vsub.f32 %v255, %v290
  %v295 = vsub.f32 %v269, %v290
  %v296 = vsub.f32 %v229, %v291
  %v297 = vsub.f32 %v243, %v291
  %v298 = vsub.f32 %v257, %v291
  %v299 = vsub.f32 %v271, %v291
  %v300 = vmul.f32 %v292, %v292
  %v301 = vmul.f32 %v293, %v293
  %v302 = vmul.f32 %v294, %v294
  %v303 = vmul.f32 %v295, %v295
  %v304 = vmul.f32 %v296, %v296
  %v305 = vmul.f32 %v297, %v297
  %v306 = vmul.f32 %v298, %v298
  %v307 = vmul.f32 %v299, %v299
  %v308 = vadd.f32 %v300, %v301
  %v309 = vadd.f32 %v308, %v302
  %v310 = vadd.f32 %v309, %v303
  %311 = vadd.xlane.f32.xlu0 %v310
  %v312 = vpop.xlane.xlu0 %311
  %v313 = vadd.f32 %v304, %v305
  %v314 = vadd.f32 %v313, %v306
  %v315 = vadd.f32 %v314, %v307
  %316 = vadd.xlane.f32.xlu0 %v315
  %v317 = vpop.xlane.xlu0 %316
  %v318 = vmul.f32 %v312, %v289
  %v319 = vmul.f32 %v317, %v289
  %v320 = vadd.f32 %v318, 1e-05
  %v321 = vadd.f32 %v319, 1e-05
  %v322 = vrsqrt.pop %v320
  %v323 = vmul.f32 %v322, %v320
  %v324 = vmul.f32 %v323, %v322
  %v325 = vmul.f32 0.5, %v324
  %v326 = vsub.f32 1.5, %v325
  %v327 = vmul.f32 %v322, %v326
  %vm328 = vweird.f32 %v320
  %vm329 = vweird.f32 %v322
  %vm330 = vmor %vm328, %vm329
  %v331 = vsel %vm330, %v322, %v327
  %v332 = vrsqrt.pop %v321
  %v333 = vmul.f32 %v332, %v321
  %v334 = vmul.f32 %v333, %v332
  %v335 = vmul.f32 0.5, %v334
  %v336 = vsub.f32 1.5, %v335
  %v337 = vmul.f32 %v332, %v336
  %vm338 = vweird.f32 %v321
  %vm339 = vweird.f32 %v332
  %vm340 = vmor %vm338, %vm339
  %v341 = vsel %vm340, %v332, %v337
  %v342 = vmul.f32 %v292, %v331
  %v343 = vmul.f32 %v293, %v331
  %v344 = vmul.f32 %v294, %v331
  %v345 = vmul.f32 %v295, %v331
  %v346 = vmul.f32 %v296, %v341
  %v347 = vmul.f32 %v297, %v341
  %v348 = vmul.f32 %v298, %v341
  %v349 = vmul.f32 %v299, %v341
  %v350 = vld [vmem:[%s2] sm:$0xff]
  %v351 = vld [vmem:[%s2 + $0x8] sm:$0xff]
  %353 = vset.pattern.permute.xlu0 0
  %354 = vperm.xlu0 %353, %v350
  %v355 = vpop.permute.xlu0 %354
  %358 = vset.pattern.permute.xlu0 0
  %359 = vperm.xlu0 %358, %v351
  %v360 = vpop.permute.xlu0 %359
  %v362 = vmul.f32 %v342, %v355
  %v363 = vmul.f32 %v343, %v355
  %v364 = vmul.f32 %v344, %v355
  %v365 = vmul.f32 %v345, %v355
  %v366 = vmul.f32 %v346, %v360
  %v367 = vmul.f32 %v347, %v360
  %v368 = vmul.f32 %v348, %v360
  %v369 = vmul.f32 %v349, %v360
  %v370 = vld [vmem:[%s3] sm:$0xff]
  %v371 = vld [vmem:[%s3 + $0x8] sm:$0xff]
  %373 = vset.pattern.permute.xlu0 0
  %374 = vperm.xlu0 %373, %v370
  %v375 = vpop.permute.xlu0 %374
  %378 = vset.pattern.permute.xlu0 0
  %379 = vperm.xlu0 %378, %v371
  %v380 = vpop.permute.xlu0 %379
  %v382 = vadd.f32 %v362, %v375
  %v383 = vadd.f32 %v363, %v375
  %v384 = vadd.f32 %v364, %v375
  %v385 = vadd.f32 %v365, %v375
  %v386 = vadd.f32 %v366, %v380
  %v387 = vadd.f32 %v367, %v380
  %v388 = vadd.f32 %v368, %v380
  %v389 = vadd.f32 %v369, %v380
  %vm390 = vcmp.ge.f32.partialorder %v382, 0.0
  %vm391 = vcmp.ge.f32.partialorder %v383, 0.0
  %vm392 = vcmp.ge.f32.partialorder %v384, 0.0
  %vm393 = vcmp.ge.f32.partialorder %v385, 0.0
  %vm394 = vcmp.ge.f32.partialorder %v386, 0.0
  %vm395 = vcmp.ge.f32.partialorder %v387, 0.0
  %vm396 = vcmp.ge.f32.partialorder %v388, 0.0
  %vm397 = vcmp.ge.f32.partialorder %v389, 0.0
  %v398 = vmul.f32 %v382, 0.2
  %v399 = vmul.f32 %v383, 0.2
  %v400 = vmul.f32 %v384, 0.2
  %v401 = vmul.f32 %v385, 0.2
  %v402 = vmul.f32 %v386, 0.2
  %v403 = vmul.f32 %v387, 0.2
  %v404 = vmul.f32 %v388, 0.2
  %v405 = vmul.f32 %v389, 0.2
  %v406 = vsel %vm390, %v382, %v398
  %v407 = vsel %vm391, %v383, %v399
  %v408 = vsel %vm392, %v384, %v400
  %v409 = vsel %vm393, %v385, %v401
  %v410 = vsel %vm394, %v386, %v402
  %v411 = vsel %vm395, %v387, %v403
  %v412 = vsel %vm396, %v388, %v404
  %v413 = vsel %vm397, %v389, %v405
  %v414 = vpack.c.bf16 %v407, %v406
  %v415 = vpack.c.bf16 %v409, %v408
  %v416 = vpack.c.bf16 %v411, %v410
  %v417 = vpack.c.bf16 %v413, %v412
  %418 = vst [vmem:[%s4] sm:$0xff] %v414
  %419 = vst [vmem:[%s4 + $0x8] sm:$0xff] %v415
  %420 = vst [vmem:[%s4 + $0x10] sm:$0xff] %v416
  %421 = vst [vmem:[%s4 + $0x18] sm:$0xff] %v417
  // Predicated region
  $region18: #{discriminator_forward.5} parent=0 // pred_check
    _
  $region19: #{discriminator_forward.5} parent=0 // pred_check_branch
    %423 = sbr.rel (0) target = $region21
  $region20: #{discriminator_forward.5} parent=0 // pred_region
    _
  $region21: #{discriminator_forward.5} parent=0 // pred_fallthru
    _
  // Predicated region
  $region22: #{discriminator_forward.5} parent=0 // pred_check
    _
  $region23: #{discriminator_forward.5} parent=0 // pred_check_branch
    %425 = sbr.rel (0) target = $region25
  $region24: #{discriminator_forward.5} parent=0 // pred_region
    _
  $region25: #{discriminator_forward.5} parent=0 // pred_fallthru
    _

// kernel: discriminator_forward.6
$region0: #{discriminator_forward.6}
  #allocation0 [shape = 'u32[]', space=smem, size = 0x4, offset = 0x4, fixed_abs, tag = 'smem constant byte address 0x4 - core index']
  #allocation1 [shape = 'u32[72,128]{1,0:T(1,128)}', space=vmem, size = 0x9000, scoped, tag = 'internal scratch']
  %s0 = inlined_call_operand.vmem [shape: bf16[32,256], index: 0, kind: input, shape index: {}]
  %s1 = inlined_call_operand.vmem [shape: bf16[256,128], index: 1, kind: input, shape index: {}]
  %s2 = inlined_call_operand.vmem [shape: f32[32,1], index: 2, kind: input, shape index: {}]
  %s3 = inlined_call_operand.vmem [shape: f32[32,1], index: 3, kind: input, shape index: {}]
  %s4 = inlined_call_operand.vmem [shape: bf16[32,128], index: 4, kind: output, shape index: {}]
  %s5 = sld [smem:[#allocation0]]
  $region26: #{discriminator_forward.6} parent=0
    _
  %s7 = ssub.s32 1, %s5
  %s8 = scalar_select 0, %s7, %s5
  // Predicated region
  $region2: #{discriminator_forward.6} parent=0 // pred_check
    _
  $region3: #{discriminator_forward.6} parent=0 // pred_check_branch
    %10 = sbr.rel (0) target = $region5
  $region4: #{discriminator_forward.6} parent=0 // pred_region
    _
  $region5: #{discriminator_forward.6} parent=0 // pred_fallthru
    _
  // Predicated region
  $region6: #{discriminator_forward.6} parent=0 // pred_check
    _
  $region7: #{discriminator_forward.6} parent=0 // pred_check_branch
    %12 = sbr.rel (0) target = $region9
  $region8: #{discriminator_forward.6} parent=0 // pred_region
    _
  $region9: #{discriminator_forward.6} parent=0 // pred_fallthru
    _
  // Predicated region
  $region10: #{discriminator_forward.6} parent=0 // pred_check
    _
  $region11: #{discriminator_forward.6} parent=0 // pred_check_branch
    %14 = sbr.rel (0) target = $region13
  $region12: #{discriminator_forward.6} parent=0 // pred_region
    _
  $region13: #{discriminator_forward.6} parent=0 // pred_fallthru
    _
  // Predicated region
  $region14: #{discriminator_forward.6} parent=0 // pred_check
    _
  $region15: #{discriminator_forward.6} parent=0 // pred_check_branch
    %16 = sbr.rel (0) target = $region17
  $region16: #{discriminator_forward.6} parent=0 // pred_region
    _
  $region17: #{discriminator_forward.6} parent=0 // pred_fallthru
    _
  %v17 = vld [vmem:[%s0] sm:$0xff]
  %v18 = vld [vmem:[%s0 + $0x8] sm:$0xff]
  %v19 = vld [vmem:[%s0 + $0x10] sm:$0xff]
  %v20 = vld [vmem:[%s0 + $0x18] sm:$0xff]
  %v21 = vld [vmem:[%s1] sm:$0xf]
  %v22 = vld [vmem:[%s1 + $0x4] sm:$0xf]
  %v23 = vld [vmem:[%s1 + $0x8] sm:$0xf]
  %v24 = vld [vmem:[%s1 + $0xc] sm:$0xf]
  %v25 = vld [vmem:[%s1 + $0x10] sm:$0xf]
  %v26 = vld [vmem:[%s1 + $0x14] sm:$0xf]
  %v27 = vld [vmem:[%s1 + $0x18] sm:$0xf]
  %v28 = vld [vmem:[%s1 + $0x1c] sm:$0xf]
  %v29 = vld [vmem:[%s1 + $0x20] sm:$0xf]
  %v30 = vld [vmem:[%s1 + $0x24] sm:$0xf]
  %v31 = vld [vmem:[%s1 + $0x28] sm:$0xf]
  %v32 = vld [vmem:[%s1 + $0x2c] sm:$0xf]
  %v33 = vld [vmem:[%s1 + $0x30] sm:$0xf]
  %v34 = vld [vmem:[%s1 + $0x34] sm:$0xf]
  %v35 = vld [vmem:[%s1 + $0x38] sm:$0xf]
  %v36 = vld [vmem:[%s1 + $0x3c] sm:$0xf]
  %v37 = vld [vmem:[%s1 + $0x40] sm:$0xf]
  %v38 = vld [vmem:[%s1 + $0x44] sm:$0xf]
  %v39 = vld [vmem:[%s1 + $0x48] sm:$0xf]
  %v40 = vld [vmem:[%s1 + $0x4c] sm:$0xf]
  %v41 = vld [vmem:[%s1 + $0x50] sm:$0xf]
  %v42 = vld [vmem:[%s1 + $0x54] sm:$0xf]
  %v43 = vld [vmem:[%s1 + $0x58] sm:$0xf]
  %v44 = vld [vmem:[%s1 + $0x5c] sm:$0xf]
  %v45 = vld [vmem:[%s1 + $0x60] sm:$0xf]
  %v46 = vld [vmem:[%s1 + $0x64] sm:$0xf]
  %v47 = vld [vmem:[%s1 + $0x68] sm:$0xf]
  %v48 = vld [vmem:[%s1 + $0x6c] sm:$0xf]
  %v49 = vld [vmem:[%s1 + $0x70] sm:$0xf]
  %v50 = vld [vmem:[%s1 + $0x74] sm:$0xf]
  %v51 = vld [vmem:[%s1 + $0x78] sm:$0xf]
  %v52 = vld [vmem:[%s1 + $0x7c] sm:$0xf]
  %v57 = vunpack.c.l.b16 %v17
  %v58 = vunpack.c.h.b16 %v17
  %v59 = vunpack.c.l.b16 %v18
  %v60 = vunpack.c.h.b16 %v18
  %v61 = vunpack.c.l.b16 %v19
  %v62 = vunpack.c.h.b16 %v19
  %v63 = vunpack.c.l.b16 %v20
  %v64 = vunpack.c.h.b16 %v20
  %v65 = vpack.c.b16 %v59, %v57
  %v66 = vpack.c.b16 %v60, %v58
  %v67 = vpack.c.b16 %v63, %v61
  %v68 = vpack.c.b16 %v64, %v62
  %v105 = vunpack.c.l.b16 %v21
  %v106 = vunpack.c.l.b16 %v22
  %v107 = vunpack.c.l.b16 %v23
  %v108 = vunpack.c.l.b16 %v24
  %v109 = vunpack.c.l.b16 %v25
  %v110 = vunpack.c.l.b16 %v26
  %v111 = vunpack.c.l.b16 %v27
  %v112 = vunpack.c.l.b16 %v28
  %v113 = vunpack.c.l.b16 %v29
  %v114 = vunpack.c.l.b16 %v30
  %v115 = vunpack.c.l.b16 %v31
  %v116 = vunpack.c.l.b16 %v32
  %v117 = vunpack.c.l.b16 %v33
  %v118 = vunpack.c.l.b16 %v34
  %v119 = vunpack.c.l.b16 %v35
  %v120 = vunpack.c.l.b16 %v36
  %v121 = vunpack.c.l.b16 %v37
  %v122 = vunpack.c.l.b16 %v38
  %v123 = vunpack.c.l.b16 %v39
  %v124 = vunpack.c.l.b16 %v40
  %v125 = vunpack.c.l.b16 %v41
  %v126 = vunpack.c.l.b16 %v42
  %v127 = vunpack.c.l.b16 %v43
  %v128 = vunpack.c.l.b16 %v44
  %v129 = vunpack.c.l.b16 %v45
  %v130 = vunpack.c.l.b16 %v46
  %v131 = vunpack.c.l.b16 %v47
  %v132 = vunpack.c.l.b16 %v48
  %v133 = vunpack.c.l.b16 %v49
  %v134 = vunpack.c.l.b16 %v50
  %v135 = vunpack.c.l.b16 %v51
  %v136 = vunpack.c.l.b16 %v52
  %v137 = vpack.c.b16 %v106, %v105
  %v138 = vpack.c.b16 %v108, %v107
  %v139 = vpack.c.b16 %v110, %v109
  %v140 = vpack.c.b16 %v112, %v111
  %v141 = vpack.c.b16 %v114, %v113
  %v142 = vpack.c.b16 %v116, %v115
  %v143 = vpack.c.b16 %v118, %v117
  %v144 = vpack.c.b16 %v120, %v119
  %v145 = vpack.c.b16 %v122, %v121
  %v146 = vpack.c.b16 %v124, %v123
  %v147 = vpack.c.b16 %v126, %v125
  %v148 = vpack.c.b16 %v128, %v127
  %v149 = vpack.c.b16 %v130, %v129
  %v150 = vpack.c.b16 %v132, %v131
  %v151 = vpack.c.b16 %v134, %v133
  %v152 = vpack.c.b16 %v136, %v135
  %169 = vmatpush.bf16.msra.mxu0 %v144
  %170 = vmatpush.bf16.msra.mxu0 %v143
  %171 = vmatpush.bf16.msra.mxu0 %v142
  %172 = vmatpush.bf16.msra.mxu0 %v141
  %173 = vmatpush.bf16.msra.mxu0 %v140
  %174 = vmatpush.bf16.msra.mxu0 %v139
  %175 = vmatpush.bf16.msra.mxu0 %v138
  %176 = vmatpush.bf16.msra.mxu0 %v137
  %177 = vmatmul.bf16.gmra.mxu0 %v65
  %v178 = vpop.f32.mrf.mxu0
  %v179 = vadd.f32 0.0, %v178
  %v180 = vpop.f32.mrf.mxu0
  %v181 = vadd.f32 0.0, %v180
  %182 = vmatmul.bf16.gmra.mxu0 %v67
  %v183 = vpop.f32.mrf.mxu0
  %v184 = vadd.f32 0.0, %v183
  %v185 = vpop.f32.mrf.mxu0
  %v186 = vadd.f32 0.0, %v185
  %187 = vdwg.mxu0
  %188 = vmatpush.bf16.msra.mxu0 %v152
  %189 = vmatpush.bf16.msra.mxu0 %v151
  %190 = vmatpush.bf16.msra.mxu0 %v150
  %191 = vmatpush.bf16.msra.mxu0 %v149
  %192 = vmatpush.bf16.msra.mxu0 %v148
  %193 = vmatpush.bf16.msra.mxu0 %v147
  %194 = vmatpush.bf16.msra.mxu0 %v146
  %195 = vmatpush.bf16.msra.mxu0 %v145
  %196 = vmatmul.bf16.gmra.mxu0 %v66
  %v197 = vpop.f32.mrf.mxu0
  %v198 = vadd.f32 %v179, %v197
  %v199 = vpop.f32.mrf.mxu0
  %v200 = vadd.f32 %v181, %v199
  %201 = vmatmul.bf16.gmra.mxu0 %v68
  %v202 = vpop.f32.mrf.mxu0
  %v203 = vadd.f32 %v184, %v202
  %v204 = vpop.f32.mrf.mxu0
  %v205 = vadd.f32 %v186, %v204
  %206 = vdwg.mxu0
  %207 = vadd.xlane.f32.xlu0 %v198
  %v208 = vpop.xlane.xlu0 %207
  %209 = vadd.xlane.f32.xlu0 %v200
  %v210 = vpop.xlane.xlu0 %209
  %211 = vadd.xlane.f32.xlu0 %v203
  %v212 = vpop.xlane.xlu0 %211
  %213 = vadd.xlane.f32.xlu0 %v205
  %v214 = vpop.xlane.xlu0 %213
  %v215 = vrcp.pop 128.0
  %v216 = vmul.f32 128.0, %v215
  %v217 = vsub.f32 1.0, %v216
  %v218 = vmul.f32 %v215, %v217
  %v219 = vadd.f32 %v215, %v218
  %vm220 = vweird.f32 %v215
  %v221 = vsel %vm220, %v215, %v219
  %v222 = vmul.f32 %v208, %v221
  %v223 = vmul.f32 %v210, %v221
  %v224 = vmul.f32 %v212, %v221
  %v225 = vmul.f32 %v214, %v221
  %v226 = vsub.f32 %v198, %v222
  %v227 = vsub.f32 %v200, %v223
  %v228 = vsub.f32 %v203, %v224
  %v229 = vsub.f32 %v205, %v225
  %v230 = vmul.f32 %v226, %v226
  %v231 = vmul.f32 %v227, %v227
  %v232 = vmul.f32 %v228, %v228
  %v233 = vmul.f32 %v229, %v229
  %234 = vadd.xlane.f32.xlu0 %v230
  %v235 = vpop.xlane.xlu0 %234
  %236 = vadd.xlane.f32.xlu0 %v231
  %v237 = vpop.xlane.xlu0 %236
  %238 = vadd.xlane.f32.xlu0 %v232
  %v239 = vpop.xlane.xlu0 %238
  %240 = vadd.xlane.f32.xlu0 %v233
  %v241 = vpop.xlane.xlu0 %240
  %v242 = vmul.f32 %v235, %v221
  %v243 = vmul.f32 %v237, %v221
  %v244 = vmul.f32 %v239, %v221
  %v245 = vmul.f32 %v241, %v221
  %v246 = vadd.f32 %v242, 1e-05
  %v247 = vadd.f32 %v243, 1e-05
  %v248 = vadd.f32 %v244, 1e-05
  %v249 = vadd.f32 %v245, 1e-05
  %v250 = vrsqrt.pop %v246
  %v251 = vmul.f32 %v250, %v246
  %v252 = vmul.f32 %v251, %v250
  %v253 = vmul.f32 0.5, %v252
  %v254 = vsub.f32 1.5, %v253
  %v255 = vmul.f32 %v250, %v254
  %vm256 = vweird.f32 %v246
  %vm257 = vweird.f32 %v250
  %vm258 = vmor %vm256, %vm257
  %v259 = vsel %vm258, %v250, %v255
  %v260 = vrsqrt.pop %v247
  %v261 = vmul.f32 %v260, %v247
  %v262 = vmul.f32 %v261, %v260
  %v263 = vmul.f32 0.5, %v262
  %v264 = vsub.f32 1.5, %v263
  %v265 = vmul.f32 %v260, %v264
  %vm266 = vweird.f32 %v247
  %vm267 = vweird.f32 %v260
  %vm268 = vmor %vm266, %vm267
  %v269 = vsel %vm268, %v260, %v265
  %v270 = vrsqrt.pop %v248
  %v271 = vmul.f32 %v270, %v248
  %v272 = vmul.f32 %v271, %v270
  %v273 = vmul.f32 0.5, %v272
  %v274 = vsub.f32 1.5, %v273
  %v275 = vmul.f32 %v270, %v274
  %vm276 = vweird.f32 %v248
  %vm277 = vweird.f32 %v270
  %vm278 = vmor %vm276, %vm277
  %v279 = vsel %vm278, %v270, %v275
  %v280 = vrsqrt.pop %v249
  %v281 = vmul.f32 %v280, %v249
  %v282 = vmul.f32 %v281, %v280
  %v283 = vmul.f32 0.5, %v282
  %v284 = vsub.f32 1.5, %v283
  %v285 = vmul.f32 %v280, %v284
  %vm286 = vweird.f32 %v249
  %vm287 = vweird.f32 %v280
  %vm288 = vmor %vm286, %vm287
  %v289 = vsel %vm288, %v280, %v285
  %v290 = vmul.f32 %v226, %v259
  %v291 = vmul.f32 %v227, %v269
  %v292 = vmul.f32 %v228, %v279
  %v293 = vmul.f32 %v229, %v289
  %v294 = vld [vmem:[%s2] sm:$0xff]
  %v295 = vld [vmem:[%s2 + $0x8] sm:$0xff]
  %v296 = vld [vmem:[%s2 + $0x10] sm:$0xff]
  %v297 = vld [vmem:[%s2 + $0x18] sm:$0xff]
  %299 = vset.pattern.permute.xlu0 0
  %300 = vperm.xlu0 %299, %v294
  %v301 = vpop.permute.xlu0 %300
  %304 = vset.pattern.permute.xlu0 0
  %305 = vperm.xlu0 %304, %v295
  %v306 = vpop.permute.xlu0 %305
  %309 = vset.pattern.permute.xlu0 0
  %310 = vperm.xlu0 %309, %v296
  %v311 = vpop.permute.xlu0 %310
  %314 = vset.pattern.permute.xlu0 0
  %315 = vperm.xlu0 %314, %v297
  %v316 = vpop.permute.xlu0 %315
  %v318 = vmul.f32 %v290, %v301
  %v319 = vmul.f32 %v291, %v306
  %v320 = vmul.f32 %v292, %v311
  %v321 = vmul.f32 %v293, %v316
  %v322 = vld [vmem:[%s3] sm:$0xff]
  %v323 = vld [vmem:[%s3 + $0x8] sm:$0xff]
  %v324 = vld [vmem:[%s3 + $0x10] sm:$0xff]
  %v325 = vld [vmem:[%s3 + $0x18] sm:$0xff]
  %327 = vset.pattern.permute.xlu0 0
  %328 = vperm.xlu0 %327, %v322
  %v329 = vpop.permute.xlu0 %328
  %332 = vset.pattern.permute.xlu0 0
  %333 = vperm.xlu0 %332, %v323
  %v334 = vpop.permute.xlu0 %333
  %337 = vset.pattern.permute.xlu0 0
  %338 = vperm.xlu0 %337, %v324
  %v339 = vpop.permute.xlu0 %338
  %342 = vset.pattern.permute.xlu0 0
  %343 = vperm.xlu0 %342, %v325
  %v344 = vpop.permute.xlu0 %343
  %v346 = vadd.f32 %v318, %v329
  %v347 = vadd.f32 %v319, %v334
  %v348 = vadd.f32 %v320, %v339
  %v349 = vadd.f32 %v321, %v344
  %vm350 = vcmp.ge.f32.partialorder %v346, 0.0
  %vm351 = vcmp.ge.f32.partialorder %v347, 0.0
  %vm352 = vcmp.ge.f32.partialorder %v348, 0.0
  %vm353 = vcmp.ge.f32.partialorder %v349, 0.0
  %v354 = vmul.f32 %v346, 0.2
  %v355 = vmul.f32 %v347, 0.2
  %v356 = vmul.f32 %v348, 0.2
  %v357 = vmul.f32 %v349, 0.2
  %v358 = vsel %vm350, %v346, %v354
  %v359 = vsel %vm351, %v347, %v355
  %v360 = vsel %vm352, %v348, %v356
  %v361 = vsel %vm353, %v349, %v357
  %v362 = vpack.c.bf16 %v358, %v358
  %v363 = vpack.c.bf16 %v359, %v359
  %v364 = vpack.c.bf16 %v360, %v360
  %v365 = vpack.c.bf16 %v361, %v361
  %366 = vst [vmem:[%s4] sm:$0xf] %v362
  %367 = vst [vmem:[%s4 + $0x4] sm:$0xf] %v363
  %368 = vst [vmem:[%s4 + $0x8] sm:$0xf] %v364
  %369 = vst [vmem:[%s4 + $0xc] sm:$0xf] %v365
  // Predicated region
  $region18: #{discriminator_forward.6} parent=0 // pred_check
    _
  $region19: #{discriminator_forward.6} parent=0 // pred_check_branch
    %371 = sbr.rel (0) target = $region21
  $region20: #{discriminator_forward.6} parent=0 // pred_region
    _
  $region21: #{discriminator_forward.6} parent=0 // pred_fallthru
    _
  // Predicated region
  $region22: #{discriminator_forward.6} parent=0 // pred_check
    _
  $region23: #{discriminator_forward.6} parent=0 // pred_check_branch
    %373 = sbr.rel (0) target = $region25
  $region24: #{discriminator_forward.6} parent=0 // pred_region
    _
  $region25: #{discriminator_forward.6} parent=0 // pred_fallthru
    _

// kernel: discriminator_forward.7
$region0: #{discriminator_forward.7}
  #allocation0 [shape = 'u32[]', space=smem, size = 0x4, offset = 0x4, fixed_abs, tag = 'smem constant byte address 0x4 - core index']
  #allocation1 [shape = 'u32[72,128]{1,0:T(1,128)}', space=vmem, size = 0x9000, scoped, tag = 'internal scratch']
  %s0 = inlined_call_operand.vmem [shape: bf16[64,512], index: 0, kind: input, shape index: {}]
  %s1 = inlined_call_operand.vmem [shape: bf16[512,32], index: 1, kind: input, shape index: {}]
  %s2 = inlined_call_operand.vmem [shape: f32[64,1], index: 2, kind: input, shape index: {}]
  %s3 = inlined_call_operand.vmem [shape: f32[64,1], index: 3, kind: input, shape index: {}]
  %s4 = inlined_call_operand.vmem [shape: f32[64,32], index: 4, kind: input, shape index: {}]
  %s5 = inlined_call_operand.vmem [shape: f32[32,2], index: 5, kind: input, shape index: {}]
  %s6 = inlined_call_operand.hbm [shape: f32[1,2], index: 6, kind: output, shape index: {}]
  %s7 = sld [smem:[#allocation0]]
  $region34: #{discriminator_forward.7} parent=0
    _
  %s9 = ssub.s32 1, %s7
  %s10 = scalar_select 0, %s9, %s7
  $region1: #{discriminator_forward.7} parent=0
    #allocation2 [shape = 'u8[512]{0}', space=vmem, size = 0x400, scoped, tag = 'output window, operand 0, single buffered']
    #allocation3 [shape = 's32[1]{0}', space=sflag, size = 0x4, scoped, tag = 'scoped memory for discriminator_forward.7']
    %11 = vsyncpa [#allocation3], 0
    // Predicated region
    $region2: #{discriminator_forward.7} parent=1 // pred_check
      _
    $region3: #{discriminator_forward.7} parent=1 // pred_check_branch
      %13 = sbr.rel (0) target = $region5
    $region4: #{discriminator_forward.7} parent=1 // pred_region
      _
    $region5: #{discriminator_forward.7} parent=1 // pred_fallthru
      _
    // Predicated region
    $region6: #{discriminator_forward.7} parent=1 // pred_check
      _
    $region7: #{discriminator_forward.7} parent=1 // pred_check_branch
      %15 = sbr.rel (0) target = $region9
    $region8: #{discriminator_forward.7} parent=1 // pred_region
      _
    $region9: #{discriminator_forward.7} parent=1 // pred_fallthru
      _
    // Predicated region
    $region10: #{discriminator_forward.7} parent=1 // pred_check
      _
    $region11: #{discriminator_forward.7} parent=1 // pred_check_branch
      %17 = sbr.rel (0) target = $region13
    $region12: #{discriminator_forward.7} parent=1 // pred_region
      _
    $region13: #{discriminator_forward.7} parent=1 // pred_fallthru
      _
    // Predicated region
    $region14: #{discriminator_forward.7} parent=1 // pred_check
      _
    $region15: #{discriminator_forward.7} parent=1 // pred_check_branch
      %19 = sbr.rel (0) target = $region17
    $region16: #{discriminator_forward.7} parent=1 // pred_region
      _
    $region17: #{discriminator_forward.7} parent=1 // pred_fallthru
      _
    // Predicated region
    $region18: #{discriminator_forward.7} parent=1 // pred_check
      _
    $region19: #{discriminator_forward.7} parent=1 // pred_check_branch
      %21 = sbr.rel (0) target = $region21
    $region20: #{discriminator_forward.7} parent=1 // pred_region
      _
    $region21: #{discriminator_forward.7} parent=1 // pred_fallthru
      _
    // Predicated region
    $region22: #{discriminator_forward.7} parent=1 // pred_check
      _
    $region23: #{discriminator_forward.7} parent=1 // pred_check_branch
      %23 = sbr.rel (0) target = $region25
    $region24: #{discriminator_forward.7} parent=1 // pred_region
      _
    $region25: #{discriminator_forward.7} parent=1 // pred_fallthru
      _
    %v24 = vld [vmem:[%s0] sm:$0xff]
    %v25 = vld [vmem:[%s0 + $0x8] sm:$0xff]
    %v26 = vld [vmem:[%s0 + $0x10] sm:$0xff]
    %v27 = vld [vmem:[%s0 + $0x18] sm:$0xff]
    %v28 = vld [vmem:[%s0 + $0x20] sm:$0xff]
    %v29 = vld [vmem:[%s0 + $0x28] sm:$0xff]
    %v30 = vld [vmem:[%s0 + $0x30] sm:$0xff]
    %v31 = vld [vmem:[%s0 + $0x38] sm:$0xff]
    %v32 = vld [vmem:[%s0 + $0x40] sm:$0xff]
    %v33 = vld [vmem:[%s0 + $0x48] sm:$0xff]
    %v34 = vld [vmem:[%s0 + $0x50] sm:$0xff]
    %v35 = vld [vmem:[%s0 + $0x58] sm:$0xff]
    %v36 = vld [vmem:[%s0 + $0x60] sm:$0xff]
    %v37 = vld [vmem:[%s0 + $0x68] sm:$0xff]
    %v38 = vld [vmem:[%s0 + $0x70] sm:$0xff]
    %v39 = vld [vmem:[%s0 + $0x78] sm:$0xff]
    %v40 = vld [vmem:[%s1] sm:$0xf]
    %v41 = vld [vmem:[%s1 + $0x4] sm:$0xf]
    %v42 = vld [vmem:[%s1 + $0x8] sm:$0xf]
    %v43 = vld [vmem:[%s1 + $0xc] sm:$0xf]
    %v44 = vld [vmem:[%s1 + $0x10] sm:$0xf]
    %v45 = vld [vmem:[%s1 + $0x14] sm:$0xf]
    %v46 = vld [vmem:[%s1 + $0x18] sm:$0xf]
    %v47 = vld [vmem:[%s1 + $0x1c] sm:$0xf]
    %v48 = vld [vmem:[%s1 + $0x20] sm:$0xf]
    %v49 = vld [vmem:[%s1 + $0x24] sm:$0xf]
    %v50 = vld [vmem:[%s1 + $0x28] sm:$0xf]
    %v51 = vld [vmem:[%s1 + $0x2c] sm:$0xf]
    %v52 = vld [vmem:[%s1 + $0x30] sm:$0xf]
    %v53 = vld [vmem:[%s1 + $0x34] sm:$0xf]
    %v54 = vld [vmem:[%s1 + $0x38] sm:$0xf]
    %v55 = vld [vmem:[%s1 + $0x3c] sm:$0xf]
    %v56 = vld [vmem:[%s1 + $0x40] sm:$0xf]
    %v57 = vld [vmem:[%s1 + $0x44] sm:$0xf]
    %v58 = vld [vmem:[%s1 + $0x48] sm:$0xf]
    %v59 = vld [vmem:[%s1 + $0x4c] sm:$0xf]
    %v60 = vld [vmem:[%s1 + $0x50] sm:$0xf]
    %v61 = vld [vmem:[%s1 + $0x54] sm:$0xf]
    %v62 = vld [vmem:[%s1 + $0x58] sm:$0xf]
    %v63 = vld [vmem:[%s1 + $0x5c] sm:$0xf]
    %v64 = vld [vmem:[%s1 + $0x60] sm:$0xf]
    %v65 = vld [vmem:[%s1 + $0x64] sm:$0xf]
    %v66 = vld [vmem:[%s1 + $0x68] sm:$0xf]
    %v67 = vld [vmem:[%s1 + $0x6c] sm:$0xf]
    %v68 = vld [vmem:[%s1 + $0x70] sm:$0xf]
    %v69 = vld [vmem:[%s1 + $0x74] sm:$0xf]
    %v70 = vld [vmem:[%s1 + $0x78] sm:$0xf]
    %v71 = vld [vmem:[%s1 + $0x7c] sm:$0xf]
    %v72 = vld [vmem:[%s1 + $0x80] sm:$0xf]
    %v73 = vld [vmem:[%s1 + $0x84] sm:$0xf]
    %v74 = vld [vmem:[%s1 + $0x88] sm:$0xf]
    %v75 = vld [vmem:[%s1 + $0x8c] sm:$0xf]
    %v76 = vld [vmem:[%s1 + $0x90] sm:$0xf]
    %v77 = vld [vmem:[%s1 + $0x94] sm:$0xf]
    %v78 = vld [vmem:[%s1 + $0x98] sm:$0xf]
    %v79 = vld [vmem:[%s1 + $0x9c] sm:$0xf]
    %v80 = vld [vmem:[%s1 + $0xa0] sm:$0xf]
    %v81 = vld [vmem:[%s1 + $0xa4] sm:$0xf]
    %v82 = vld [vmem:[%s1 + $0xa8] sm:$0xf]
    %v83 = vld [vmem:[%s1 + $0xac] sm:$0xf]
    %v84 = vld [vmem:[%s1 + $0xb0] sm:$0xf]
    %v85 = vld [vmem:[%s1 + $0xb4] sm:$0xf]
    %v86 = vld [vmem:[%s1 + $0xb8] sm:$0xf]
    %v87 = vld [vmem:[%s1 + $0xbc] sm:$0xf]
    %v88 = vld [vmem:[%s1 + $0xc0] sm:$0xf]
    %v89 = vld [vmem:[%s1 + $0xc4] sm:$0xf]
    %v90 = vld [vmem:[%s1 + $0xc8] sm:$0xf]
    %v91 = vld [vmem:[%s1 + $0xcc] sm:$0xf]
    %v92 = vld [vmem:[%s1 + $0xd0] sm:$0xf]
    %v93 = vld [vmem:[%s1 + $0xd4] sm:$0xf]
    %v94 = vld [vmem:[%s1 + $0xd8] sm:$0xf]
    %v95 = vld [vmem:[%s1 + $0xdc] sm:$0xf]
    %v96 = vld [vmem:[%s1 + $0xe0] sm:$0xf]
    %v97 = vld [vmem:[%s1 + $0xe4] sm:$0xf]
    %v98 = vld [vmem:[%s1 + $0xe8] sm:$0xf]
    %v99 = vld [vmem:[%s1 + $0xec] sm:$0xf]
    %v100 = vld [vmem:[%s1 + $0xf0] sm:$0xf]
    %v101 = vld [vmem:[%s1 + $0xf4] sm:$0xf]
    %v102 = vld [vmem:[%s1 + $0xf8] sm:$0xf]
    %v103 = vld [vmem:[%s1 + $0xfc] sm:$0xf]
    %v120 = vunpack.c.l.b16 %v24
    %v121 = vunpack.c.h.b16 %v24
    %v122 = vunpack.c.l.b16 %v25
    %v123 = vunpack.c.h.b16 %v25
    %v124 = vunpack.c.l.b16 %v26
    %v125 = vunpack.c.h.b16 %v26
    %v126 = vunpack.c.l.b16 %v27
    %v127 = vunpack.c.h.b16 %v27
    %v128 = vunpack.c.l.b16 %v28
    %v129 = vunpack.c.h.b16 %v28
    %v130 = vunpack.c.l.b16 %v29
    %v131 = vunpack.c.h.b16 %v29
    %v132 = vunpack.c.l.b16 %v30
    %v133 = vunpack.c.h.b16 %v30
    %v134 = vunpack.c.l.b16 %v31
    %v135 = vunpack.c.h.b16 %v31
    %v136 = vunpack.c.l.b16 %v32
    %v137 = vunpack.c.h.b16 %v32
    %v138 = vunpack.c.l.b16 %v33
    %v139 = vunpack.c.h.b16 %v33
    %v140 = vunpack.c.l.b16 %v34
    %v141 = vunpack.c.h.b16 %v34
    %v142 = vunpack.c.l.b16 %v35
    %v143 = vunpack.c.h.b16 %v35
    %v144 = vunpack.c.l.b16 %v36
    %v145 = vunpack.c.h.b16 %v36
    %v146 = vunpack.c.l.b16 %v37
    %v147 = vunpack.c.h.b16 %v37
    %v148 = vunpack.c.l.b16 %v38
    %v149 = vunpack.c.h.b16 %v38
    %v150 = vunpack.c.l.b16 %v39
    %v151 = vunpack.c.h.b16 %v39
    %v152 = vpack.c.b16 %v124, %v120
    %v153 = vpack.c.b16 %v125, %v121
    %v154 = vpack.c.b16 %v126, %v122
    %v155 = vpack.c.b16 %v127, %v123
    %v156 = vpack.c.b16 %v132, %v128
    %v157 = vpack.c.b16 %v133, %v129
    %v158 = vpack.c.b16 %v134, %v130
    %v159 = vpack.c.b16 %v135, %v131
    %v160 = vpack.c.b16 %v140, %v136
    %v161 = vpack.c.b16 %v141, %v137
    %v162 = vpack.c.b16 %v142, %v138
    %v163 = vpack.c.b16 %v143, %v139
    %v164 = vpack.c.b16 %v148, %v144
    %v165 = vpack.c.b16 %v149, %v145
    %v166 = vpack.c.b16 %v150, %v146
    %v167 = vpack.c.b16 %v151, %v147
    %v248 = vunpack.c.l.b16 %v40
    %v249 = vunpack.c.l.b16 %v41
    %v250 = vunpack.c.l.b16 %v42
    %v251 = vunpack.c.l.b16 %v43
    %v252 = vunpack.c.l.b16 %v44
    %v253 = vunpack.c.l.b16 %v45
    %v254 = vunpack.c.l.b16 %v46
    %v255 = vunpack.c.l.b16 %v47
    %v256 = vunpack.c.l.b16 %v48
    %v257 = vunpack.c.l.b16 %v49
    %v258 = vunpack.c.l.b16 %v50
    %v259 = vunpack.c.l.b16 %v51
    %v260 = vunpack.c.l.b16 %v52
    %v261 = vunpack.c.l.b16 %v53
    %v262 = vunpack.c.l.b16 %v54
    %v263 = vunpack.c.l.b16 %v55
    %v264 = vunpack.c.l.b16 %v56
    %v265 = vunpack.c.l.b16 %v57
    %v266 = vunpack.c.l.b16 %v58
    %v267 = vunpack.c.l.b16 %v59
    %v268 = vunpack.c.l.b16 %v60
    %v269 = vunpack.c.l.b16 %v61
    %v270 = vunpack.c.l.b16 %v62
    %v271 = vunpack.c.l.b16 %v63
    %v272 = vunpack.c.l.b16 %v64
    %v273 = vunpack.c.l.b16 %v65
    %v274 = vunpack.c.l.b16 %v66
    %v275 = vunpack.c.l.b16 %v67
    %v276 = vunpack.c.l.b16 %v68
    %v277 = vunpack.c.l.b16 %v69
    %v278 = vunpack.c.l.b16 %v70
    %v279 = vunpack.c.l.b16 %v71
    %v280 = vunpack.c.l.b16 %v72
    %v281 = vunpack.c.l.b16 %v73
    %v282 = vunpack.c.l.b16 %v74
    %v283 = vunpack.c.l.b16 %v75
    %v284 = vunpack.c.l.b16 %v76
    %v285 = vunpack.c.l.b16 %v77
    %v286 = vunpack.c.l.b16 %v78
    %v287 = vunpack.c.l.b16 %v79
    %v288 = vunpack.c.l.b16 %v80
    %v289 = vunpack.c.l.b16 %v81
    %v290 = vunpack.c.l.b16 %v82
    %v291 = vunpack.c.l.b16 %v83
    %v292 = vunpack.c.l.b16 %v84
    %v293 = vunpack.c.l.b16 %v85
    %v294 = vunpack.c.l.b16 %v86
    %v295 = vunpack.c.l.b16 %v87
    %v296 = vunpack.c.l.b16 %v88
    %v297 = vunpack.c.l.b16 %v89
    %v298 = vunpack.c.l.b16 %v90
    %v299 = vunpack.c.l.b16 %v91
    %v300 = vunpack.c.l.b16 %v92
    %v301 = vunpack.c.l.b16 %v93
    %v302 = vunpack.c.l.b16 %v94
    %v303 = vunpack.c.l.b16 %v95
    %v304 = vunpack.c.l.b16 %v96
    %v305 = vunpack.c.l.b16 %v97
    %v306 = vunpack.c.l.b16 %v98
    %v307 = vunpack.c.l.b16 %v99
    %v308 = vunpack.c.l.b16 %v100
    %v309 = vunpack.c.l.b16 %v101
    %v310 = vunpack.c.l.b16 %v102
    %v311 = vunpack.c.l.b16 %v103
    %v312 = vpack.c.b16 %v249, %v248
    %v313 = vpack.c.b16 %v251, %v250
    %v314 = vpack.c.b16 %v253, %v252
    %v315 = vpack.c.b16 %v255, %v254
    %v316 = vpack.c.b16 %v257, %v256
    %v317 = vpack.c.b16 %v259, %v258
    %v318 = vpack.c.b16 %v261, %v260
    %v319 = vpack.c.b16 %v263, %v262
    %v320 = vpack.c.b16 %v265, %v264
    %v321 = vpack.c.b16 %v267, %v266
    %v322 = vpack.c.b16 %v269, %v268
    %v323 = vpack.c.b16 %v271, %v270
    %v324 = vpack.c.b16 %v273, %v272
    %v325 = vpack.c.b16 %v275, %v274
    %v326 = vpack.c.b16 %v277, %v276
    %v327 = vpack.c.b16 %v279, %v278
    %v328 = vpack.c.b16 %v281, %v280
    %v329 = vpack.c.b16 %v283, %v282
    %v330 = vpack.c.b16 %v285, %v284
    %v331 = vpack.c.b16 %v287, %v286
    %v332 = vpack.c.b16 %v289, %v288
    %v333 = vpack.c.b16 %v291, %v290
    %v334 = vpack.c.b16 %v293, %v292
    %v335 = vpack.c.b16 %v295, %v294
    %v336 = vpack.c.b16 %v297, %v296
    %v337 = vpack.c.b16 %v299, %v298
    %v338 = vpack.c.b16 %v301, %v300
    %v339 = vpack.c.b16 %v303, %v302
    %v340 = vpack.c.b16 %v305, %v304
    %v341 = vpack.c.b16 %v307, %v306
    %v342 = vpack.c.b16 %v309, %v308
    %v343 = vpack.c.b16 %v311, %v310
    %376 = vmatpush.bf16.msra.mxu0 %v319
    %377 = vmatpush.bf16.msra.mxu0 %v318
    %378 = vmatpush.bf16.msra.mxu0 %v317
    %379 = vmatpush.bf16.msra.mxu0 %v316
    %380 = vmatpush.bf16.msra.mxu0 %v315
    %381 = vmatpush.bf16.msra.mxu0 %v314
    %382 = vmatpush.bf16.msra.mxu0 %v313
    %383 = vmatpush.bf16.msra.mxu0 %v312
    %384 = vmatmul.bf16.gmra.mxu0 %v152
    %v385 = vpop.f32.mrf.mxu0
    %v386 = vadd.f32 0.0, %v385
    %v387 = vpop.f32.mrf.mxu0
    %v388 = vadd.f32 0.0, %v387
    %389 = vmatmul.bf16.gmra.mxu0 %v156
    %v390 = vpop.f32.mrf.mxu0
    %v391 = vadd.f32 0.0, %v390
    %v392 = vpop.f32.mrf.mxu0
    %v393 = vadd.f32 0.0, %v392
    %394 = vmatmul.bf16.gmra.mxu0 %v160
    %v395 = vpop.f32.mrf.mxu0
    %v396 = vadd.f32 0.0, %v395
    %v397 = vpop.f32.mrf.mxu0
    %v398 = vadd.f32 0.0, %v397
    %399 = vmatmul.bf16.gmra.mxu0 %v164
    %v400 = vpop.f32.mrf.mxu0
    %v401 = vadd.f32 0.0, %v400
    %v402 = vpop.f32.mrf.mxu0
    %v403 = vadd.f32 0.0, %v402
    %404 = vdwg.mxu0
    %405 = vmatpush.bf16.msra.mxu0 %v327
    %406 = vmatpush.bf16.msra.mxu0 %v326
    %407 = vmatpush.bf16.msra.mxu0 %v325
    %408 = vmatpush.bf16.msra.mxu0 %v324
    %409 = vmatpush.bf16.msra.mxu0 %v323
    %410 = vmatpush.bf16.msra.mxu0 %v322
    %411 = vmatpush.bf16.msra.mxu0 %v321
    %412 = vmatpush.bf16.msra.mxu0 %v320
    %413 = vmatmul.bf16.gmra.mxu0 %v153
    %v414 = vpop.f32.mrf.mxu0
    %v415 = vadd.f32 %v386, %v414
    %v416 = vpop.f32.mrf.mxu0
    %v417 = vadd.f32 %v388, %v416
    %418 = vmatmul.bf16.gmra.mxu0 %v157
    %v419 = vpop.f32.mrf.mxu0
    %v420 = vadd.f32 %v391, %v419
    %v421 = vpop.f32.mrf.mxu0
    %v422 = vadd.f32 %v393, %v421
    %423 = vmatmul.bf16.gmra.mxu0 %v161
    %v424 = vpop.f32.mrf.mxu0
    %v425 = vadd.f32 %v396, %v424
    %v426 = vpop.f32.mrf.mxu0
    %v427 = vadd.f32 %v398, %v426
    %428 = vmatmul.bf16.gmra.mxu0 %v165
    %v429 = vpop.f32.mrf.mxu0
    %v430 = vadd.f32 %v401, %v429
    %v431 = vpop.f32.mrf.mxu0
    %v432 = vadd.f32 %v403, %v431
    %433 = vdwg.mxu0
    %434 = vmatpush.bf16.msra.mxu0 %v335
    %435 = vmatpush.bf16.msra.mxu0 %v334
    %436 = vmatpush.bf16.msra.mxu0 %v333
    %437 = vmatpush.bf16.msra.mxu0 %v332
    %438 = vmatpush.bf16.msra.mxu0 %v331
    %439 = vmatpush.bf16.msra.mxu0 %v330
    %440 = vmatpush.bf16.msra.mxu0 %v329
    %441 = vmatpush.bf16.msra.mxu0 %v328
    %442 = vmatmul.bf16.gmra.mxu0 %v154
    %v443 = vpop.f32.mrf.mxu0
    %v444 = vadd.f32 %v415, %v443
    %v445 = vpop.f32.mrf.mxu0
    %v446 = vadd.f32 %v417, %v445
    %447 = vmatmul.bf16.gmra.mxu0 %v158
    %v448 = vpop.f32.mrf.mxu0
    %v449 = vadd.f32 %v420, %v448
    %v450 = vpop.f32.mrf.mxu0
    %v451 = vadd.f32 %v422, %v450
    %452 = vmatmul.bf16.gmra.mxu0 %v162
    %v453 = vpop.f32.mrf.mxu0
    %v454 = vadd.f32 %v425, %v453
    %v455 = vpop.f32.mrf.mxu0
    %v456 = vadd.f32 %v427, %v455
    %457 = vmatmul.bf16.gmra.mxu0 %v166
    %v458 = vpop.f32.mrf.mxu0
    %v459 = vadd.f32 %v430, %v458
    %v460 = vpop.f32.mrf.mxu0
    %v461 = vadd.f32 %v432, %v460
    %462 = vdwg.mxu0
    %463 = vmatpush.bf16.msra.mxu0 %v343
    %464 = vmatpush.bf16.msra.mxu0 %v342
    %465 = vmatpush.bf16.msra.mxu0 %v341
    %466 = vmatpush.bf16.msra.mxu0 %v340
    %467 = vmatpush.bf16.msra.mxu0 %v339
    %468 = vmatpush.bf16.msra.mxu0 %v338
    %469 = vmatpush.bf16.msra.mxu0 %v337
    %470 = vmatpush.bf16.msra.mxu0 %v336
    %471 = vmatmul.bf16.gmra.mxu0 %v155
    %v472 = vpop.f32.mrf.mxu0
    %v473 = vadd.f32 %v444, %v472
    %v474 = vpop.f32.mrf.mxu0
    %v475 = vadd.f32 %v446, %v474
    %476 = vmatmul.bf16.gmra.mxu0 %v159
    %v477 = vpop.f32.mrf.mxu0
    %v478 = vadd.f32 %v449, %v477
    %v479 = vpop.f32.mrf.mxu0
    %v480 = vadd.f32 %v451, %v479
    %481 = vmatmul.bf16.gmra.mxu0 %v163
    %v482 = vpop.f32.mrf.mxu0
    %v483 = vadd.f32 %v454, %v482
    %v484 = vpop.f32.mrf.mxu0
    %v485 = vadd.f32 %v456, %v484
    %486 = vmatmul.bf16.gmra.mxu0 %v167
    %v487 = vpop.f32.mrf.mxu0
    %v488 = vadd.f32 %v459, %v487
    %v489 = vpop.f32.mrf.mxu0
    %v490 = vadd.f32 %v461, %v489
    %491 = vdwg.mxu0
    %vm492 = vcmask 261120
    %v493 = vsel %vm492, %v473, 0.0
    %494 = vadd.xlane.f32.xlu0 %v493
    %v495 = vpop.xlane.xlu0 %494
    %v496 = vsel %vm492, %v475, 0.0
    %497 = vadd.xlane.f32.xlu0 %v496
    %v498 = vpop.xlane.xlu0 %497
    %v499 = vsel %vm492, %v478, 0.0
    %500 = vadd.xlane.f32.xlu0 %v499
    %v501 = vpop.xlane.xlu0 %500
    %v502 = vsel %vm492, %v480, 0.0
    %503 = vadd.xlane.f32.xlu0 %v502
    %v504 = vpop.xlane.xlu0 %503
    %v505 = vsel %vm492, %v483, 0.0
    %506 = vadd.xlane.f32.xlu0 %v505
    %v507 = vpop.xlane.xlu0 %506
    %v508 = vsel %vm492, %v485, 0.0
    %509 = vadd.xlane.f32.xlu0 %v508
    %v510 = vpop.xlane.xlu0 %509
    %v511 = vsel %vm492, %v488, 0.0
    %512 = vadd.xlane.f32.xlu0 %v511
    %v513 = vpop.xlane.xlu0 %512
    %v514 = vsel %vm492, %v490, 0.0
    %515 = vadd.xlane.f32.xlu0 %v514
    %v516 = vpop.xlane.xlu0 %515
    %v517 = vrcp.pop 32.0
    %v518 = vmul.f32 32.0, %v517
    %v519 = vsub.f32 1.0, %v518
    %v520 = vmul.f32 %v517, %v519
    %v521 = vadd.f32 %v517, %v520
    %vm522 = vweird.f32 %v517
    %v523 = vsel %vm522, %v517, %v521
    %v524 = vmul.f32 %v495, %v523
    %v525 = vmul.f32 %v498, %v523
    %v526 = vmul.f32 %v501, %v523
    %v527 = vmul.f32 %v504, %v523
    %v528 = vmul.f32 %v507, %v523
    %v529 = vmul.f32 %v510, %v523
    %v530 = vmul.f32 %v513, %v523
    %v531 = vmul.f32 %v516, %v523
    %v532 = vsub.f32 %v473, %v524
    %v533 = vsub.f32 %v475, %v525
    %v534 = vsub.f32 %v478, %v526
    %v535 = vsub.f32 %v480, %v527
    %v536 = vsub.f32 %v483, %v528
    %v537 = vsub.f32 %v485, %v529
    %v538 = vsub.f32 %v488, %v530
    %v539 = vsub.f32 %v490, %v531
    %v540 = vmul.f32 %v532, %v532
    %v541 = vmul.f32 %v533, %v533
    %v542 = vmul.f32 %v534, %v534
    %v543 = vmul.f32 %v535, %v535
    %v544 = vmul.f32 %v536, %v536
    %v545 = vmul.f32 %v537, %v537
    %v546 = vmul.f32 %v538, %v538
    %v547 = vmul.f32 %v539, %v539
    %v548 = vsel %vm492, %v540, 0.0
    %549 = vadd.xlane.f32.xlu0 %v548
    %v550 = vpop.xlane.xlu0 %549
    %v551 = vsel %vm492, %v541, 0.0
    %552 = vadd.xlane.f32.xlu0 %v551
    %v553 = vpop.xlane.xlu0 %552
    %v554 = vsel %vm492, %v542, 0.0
    %555 = vadd.xlane.f32.xlu0 %v554
    %v556 = vpop.xlane.xlu0 %555
    %v557 = vsel %vm492, %v543, 0.0
    %558 = vadd.xlane.f32.xlu0 %v557
    %v559 = vpop.xlane.xlu0 %558
    %v560 = vsel %vm492, %v544, 0.0
    %561 = vadd.xlane.f32.xlu0 %v560
    %v562 = vpop.xlane.xlu0 %561
    %v563 = vsel %vm492, %v545, 0.0
    %564 = vadd.xlane.f32.xlu0 %v563
    %v565 = vpop.xlane.xlu0 %564
    %v566 = vsel %vm492, %v546, 0.0
    %567 = vadd.xlane.f32.xlu0 %v566
    %v568 = vpop.xlane.xlu0 %567
    %v569 = vsel %vm492, %v547, 0.0
    %570 = vadd.xlane.f32.xlu0 %v569
    %v571 = vpop.xlane.xlu0 %570
    %v572 = vmul.f32 %v550, %v523
    %v573 = vmul.f32 %v553, %v523
    %v574 = vmul.f32 %v556, %v523
    %v575 = vmul.f32 %v559, %v523
    %v576 = vmul.f32 %v562, %v523
    %v577 = vmul.f32 %v565, %v523
    %v578 = vmul.f32 %v568, %v523
    %v579 = vmul.f32 %v571, %v523
    %v580 = vadd.f32 %v572, 1e-05
    %v581 = vadd.f32 %v573, 1e-05
    %v582 = vadd.f32 %v574, 1e-05
    %v583 = vadd.f32 %v575, 1e-05
    %v584 = vadd.f32 %v576, 1e-05
    %v585 = vadd.f32 %v577, 1e-05
    %v586 = vadd.f32 %v578, 1e-05
    %v587 = vadd.f32 %v579, 1e-05
    %v588 = vrsqrt.pop %v580
    %v589 = vmul.f32 %v588, %v580
    %v590 = vmul.f32 %v589, %v588
    %v591 = vmul.f32 0.5, %v590
    %v592 = vsub.f32 1.5, %v591
    %v593 = vmul.f32 %v588, %v592
    %vm594 = vweird.f32 %v580
    %vm595 = vweird.f32 %v588
    %vm596 = vmor %vm594, %vm595
    %v597 = vsel %vm596, %v588, %v593
    %v598 = vrsqrt.pop %v581
    %v599 = vmul.f32 %v598, %v581
    %v600 = vmul.f32 %v599, %v598
    %v601 = vmul.f32 0.5, %v600
    %v602 = vsub.f32 1.5, %v601
    %v603 = vmul.f32 %v598, %v602
    %vm604 = vweird.f32 %v581
    %vm605 = vweird.f32 %v598
    %vm606 = vmor %vm604, %vm605
    %v607 = vsel %vm606, %v598, %v603
    %v608 = vrsqrt.pop %v582
    %v609 = vmul.f32 %v608, %v582
    %v610 = vmul.f32 %v609, %v608
    %v611 = vmul.f32 0.5, %v610
    %v612 = vsub.f32 1.5, %v611
    %v613 = vmul.f32 %v608, %v612
    %vm614 = vweird.f32 %v582
    %vm615 = vweird.f32 %v608
    %vm616 = vmor %vm614, %vm615
    %v617 = vsel %vm616, %v608, %v613
    %v618 = vrsqrt.pop %v583
    %v619 = vmul.f32 %v618, %v583
    %v620 = vmul.f32 %v619, %v618
    %v621 = vmul.f32 0.5, %v620
    %v622 = vsub.f32 1.5, %v621
    %v623 = vmul.f32 %v618, %v622
    %vm624 = vweird.f32 %v583
    %vm625 = vweird.f32 %v618
    %vm626 = vmor %vm624, %vm625
    %v627 = vsel %vm626, %v618, %v623
    %v628 = vrsqrt.pop %v584
    %v629 = vmul.f32 %v628, %v584
    %v630 = vmul.f32 %v629, %v628
    %v631 = vmul.f32 0.5, %v630
    %v632 = vsub.f32 1.5, %v631
    %v633 = vmul.f32 %v628, %v632
    %vm634 = vweird.f32 %v584
    %vm635 = vweird.f32 %v628
    %vm636 = vmor %vm634, %vm635
    %v637 = vsel %vm636, %v628, %v633
    %v638 = vrsqrt.pop %v585
    %v639 = vmul.f32 %v638, %v585
    %v640 = vmul.f32 %v639, %v638
    %v641 = vmul.f32 0.5, %v640
    %v642 = vsub.f32 1.5, %v641
    %v643 = vmul.f32 %v638, %v642
    %vm644 = vweird.f32 %v585
    %vm645 = vweird.f32 %v638
    %vm646 = vmor %vm644, %vm645
    %v647 = vsel %vm646, %v638, %v643
    %v648 = vrsqrt.pop %v586
    %v649 = vmul.f32 %v648, %v586
    %v650 = vmul.f32 %v649, %v648
    %v651 = vmul.f32 0.5, %v650
    %v652 = vsub.f32 1.5, %v651
    %v653 = vmul.f32 %v648, %v652
    %vm654 = vweird.f32 %v586
    %vm655 = vweird.f32 %v648
    %vm656 = vmor %vm654, %vm655
    %v657 = vsel %vm656, %v648, %v653
    %v658 = vrsqrt.pop %v587
    %v659 = vmul.f32 %v658, %v587
    %v660 = vmul.f32 %v659, %v658
    %v661 = vmul.f32 0.5, %v660
    %v662 = vsub.f32 1.5, %v661
    %v663 = vmul.f32 %v658, %v662
    %vm664 = vweird.f32 %v587
    %vm665 = vweird.f32 %v658
    %vm666 = vmor %vm664, %vm665
    %v667 = vsel %vm666, %v658, %v663
    %v668 = vmul.f32 %v532, %v597
    %v669 = vmul.f32 %v533, %v607
    %v670 = vmul.f32 %v534, %v617
    %v671 = vmul.f32 %v535, %v627
    %v672 = vmul.f32 %v536, %v637
    %v673 = vmul.f32 %v537, %v647
    %v674 = vmul.f32 %v538, %v657
    %v675 = vmul.f32 %v539, %v667
    %v676 = vld [vmem:[%s2] sm:$0xff]
    %v677 = vld [vmem:[%s2 + $0x8] sm:$0xff]
    %v678 = vld [vmem:[%s2 + $0x10] sm:$0xff]
    %v679 = vld [vmem:[%s2 + $0x18] sm:$0xff]
    %v680 = vld [vmem:[%s2 + $0x20] sm:$0xff]
    %v681 = vld [vmem:[%s2 + $0x28] sm:$0xff]
    %v682 = vld [vmem:[%s2 + $0x30] sm:$0xff]
    %v683 = vld [vmem:[%s2 + $0x38] sm:$0xff]
    %685 = vset.pattern.permute.xlu0 0
    %686 = vperm.xlu0 %685, %v676
    %v687 = vpop.permute.xlu0 %686
    %690 = vset.pattern.permute.xlu0 0
    %691 = vperm.xlu0 %690, %v677
    %v692 = vpop.permute.xlu0 %691
    %695 = vset.pattern.permute.xlu0 0
    %696 = vperm.xlu0 %695, %v678
    %v697 = vpop.permute.xlu0 %696
    %700 = vset.pattern.permute.xlu0 0
    %701 = vperm.xlu0 %700, %v679
    %v702 = vpop.permute.xlu0 %701
    %705 = vset.pattern.permute.xlu0 0
    %706 = vperm.xlu0 %705, %v680
    %v707 = vpop.permute.xlu0 %706
    %710 = vset.pattern.permute.xlu0 0
    %711 = vperm.xlu0 %710, %v681
    %v712 = vpop.permute.xlu0 %711
    %715 = vset.pattern.permute.xlu0 0
    %716 = vperm.xlu0 %715, %v682
    %v717 = vpop.permute.xlu0 %716
    %720 = vset.pattern.permute.xlu0 0
    %721 = vperm.xlu0 %720, %v683
    %v722 = vpop.permute.xlu0 %721
    %v724 = vmul.f32 %v668, %v687
    %v725 = vmul.f32 %v669, %v692
    %v726 = vmul.f32 %v670, %v697
    %v727 = vmul.f32 %v671, %v702
    %v728 = vmul.f32 %v672, %v707
    %v729 = vmul.f32 %v673, %v712
    %v730 = vmul.f32 %v674, %v717
    %v731 = vmul.f32 %v675, %v722
    %v732 = vld [vmem:[%s3] sm:$0xff]
    %v733 = vld [vmem:[%s3 + $0x8] sm:$0xff]
    %v734 = vld [vmem:[%s3 + $0x10] sm:$0xff]
    %v735 = vld [vmem:[%s3 + $0x18] sm:$0xff]
    %v736 = vld [vmem:[%s3 + $0x20] sm:$0xff]
    %v737 = vld [vmem:[%s3 + $0x28] sm:$0xff]
    %v738 = vld [vmem:[%s3 + $0x30] sm:$0xff]
    %v739 = vld [vmem:[%s3 + $0x38] sm:$0xff]
    %741 = vset.pattern.permute.xlu0 0
    %742 = vperm.xlu0 %741, %v732
    %v743 = vpop.permute.xlu0 %742
    %746 = vset.pattern.permute.xlu0 0
    %747 = vperm.xlu0 %746, %v733
    %v748 = vpop.permute.xlu0 %747
    %751 = vset.pattern.permute.xlu0 0
    %752 = vperm.xlu0 %751, %v734
    %v753 = vpop.permute.xlu0 %752
    %756 = vset.pattern.permute.xlu0 0
    %757 = vperm.xlu0 %756, %v735
    %v758 = vpop.permute.xlu0 %757
    %761 = vset.pattern.permute.xlu0 0
    %762 = vperm.xlu0 %761, %v736
    %v763 = vpop.permute.xlu0 %762
    %766 = vset.pattern.permute.xlu0 0
    %767 = vperm.xlu0 %766, %v737
    %v768 = vpop.permute.xlu0 %767
    %771 = vset.pattern.permute.xlu0 0
    %772 = vperm.xlu0 %771, %v738
    %v773 = vpop.permute.xlu0 %772
    %776 = vset.pattern.permute.xlu0 0
    %777 = vperm.xlu0 %776, %v739
    %v778 = vpop.permute.xlu0 %777
    %v780 = vadd.f32 %v724, %v743
    %v781 = vadd.f32 %v725, %v748
    %v782 = vadd.f32 %v726, %v753
    %v783 = vadd.f32 %v727, %v758
    %v784 = vadd.f32 %v728, %v763
    %v785 = vadd.f32 %v729, %v768
    %v786 = vadd.f32 %v730, %v773
    %v787 = vadd.f32 %v731, %v778
    %vm788 = vcmp.ge.f32.partialorder %v780, 0.0
    %vm789 = vcmp.ge.f32.partialorder %v781, 0.0
    %vm790 = vcmp.ge.f32.partialorder %v782, 0.0
    %vm791 = vcmp.ge.f32.partialorder %v783, 0.0
    %vm792 = vcmp.ge.f32.partialorder %v784, 0.0
    %vm793 = vcmp.ge.f32.partialorder %v785, 0.0
    %vm794 = vcmp.ge.f32.partialorder %v786, 0.0
    %vm795 = vcmp.ge.f32.partialorder %v787, 0.0
    %v796 = vmul.f32 %v780, 0.2
    %v797 = vmul.f32 %v781, 0.2
    %v798 = vmul.f32 %v782, 0.2
    %v799 = vmul.f32 %v783, 0.2
    %v800 = vmul.f32 %v784, 0.2
    %v801 = vmul.f32 %v785, 0.2
    %v802 = vmul.f32 %v786, 0.2
    %v803 = vmul.f32 %v787, 0.2
    %v804 = vsel %vm788, %v780, %v796
    %v805 = vsel %vm789, %v781, %v797
    %v806 = vsel %vm790, %v782, %v798
    %v807 = vsel %vm791, %v783, %v799
    %v808 = vsel %vm792, %v784, %v800
    %v809 = vsel %vm793, %v785, %v801
    %v810 = vsel %vm794, %v786, %v802
    %v811 = vsel %vm795, %v787, %v803
    %v812 = vld [vmem:[%s4] sm:$0xff]
    %v813 = vld [vmem:[%s4 + $0x8] sm:$0xff]
    %v814 = vld [vmem:[%s4 + $0x10] sm:$0xff]
    %v815 = vld [vmem:[%s4 + $0x18] sm:$0xff]
    %v816 = vld [vmem:[%s4 + $0x20] sm:$0xff]
    %v817 = vld [vmem:[%s4 + $0x28] sm:$0xff]
    %v818 = vld [vmem:[%s4 + $0x30] sm:$0xff]
    %v819 = vld [vmem:[%s4 + $0x38] sm:$0xff]
    %v820 = vmul.f32 %v804, %v812
    %v821 = vmul.f32 %v805, %v813
    %v822 = vmul.f32 %v806, %v814
    %v823 = vmul.f32 %v807, %v815
    %v824 = vmul.f32 %v808, %v816
    %v825 = vmul.f32 %v809, %v817
    %v826 = vmul.f32 %v810, %v818
    %v827 = vmul.f32 %v811, %v819
    %v828 = vsel %vm492, %v820, 0.0
    %v829 = vsel %vm492, %v821, 0.0
    %v830 = vadd.f32 %v828, %v829
    %v831 = vsel %vm492, %v822, 0.0
    %v832 = vadd.f32 %v830, %v831
    %v833 = vsel %vm492, %v823, 0.0
    %v834 = vadd.f32 %v832, %v833
    %v835 = vsel %vm492, %v824, 0.0
    %v836 = vadd.f32 %v834, %v835
    %v837 = vsel %vm492, %v825, 0.0
    %v838 = vadd.f32 %v836, %v837
    %v839 = vsel %vm492, %v826, 0.0
    %v840 = vadd.f32 %v838, %v839
    %v841 = vsel %vm492, %v827, 0.0
    %v842 = vadd.f32 %v840, %v841
    %v843 = vrot.slane %v842, 4
    %v844 = vadd.f32 %v842, %v843
    %v845 = vrot.slane %v844, 2
    %v846 = vadd.f32 %v844, %v845
    %v847 = vrot.slane %v846, 1
    %v848 = vadd.f32 %v846, %v847
    %v849 = vld [vmem:[%s5] sm:$0xff]
    %v850 = vld [vmem:[%s5 + $0x8] sm:$0xff]
    %v851 = vld [vmem:[%s5 + $0x10] sm:$0xff]
    %v852 = vld [vmem:[%s5 + $0x18] sm:$0xff]
    %v854 = vsel %vm492, %v848, 0
    %856 = vmatpush.msra.mxu0 0.0
    %857 = vmatpush.msra.mxu0 0.0
    %858 = vmatpush.msra.mxu0 0.0
    %859 = vmatpush.msra.mxu0 0.0
    %860 = vmatpush.msra.mxu0 0.0
    %861 = vmatpush.msra.mxu0 0.0
    %862 = vmatpush.msra.mxu0 0.0
    %863 = vmatpush.msra.mxu0 0.0
    %864 = vmatpush.msra.mxu0 0.0
    %865 = vmatpush.msra.mxu0 0.0
    %866 = vmatpush.msra.mxu0 0.0
    %867 = vmatpush.msra.mxu0 0.0
    %868 = vmatpush.msra.mxu0 %v852
    %869 = vmatpush.msra.mxu0 %v851
    %870 = vmatpush.msra.mxu0 %v850
    %871 = vmatpush.msra.mxu0 %v849
    %872 = vmatmul.f32.gmra.mxu0 %v854
    %v873 = vpop.f32.mrf.mxu0
    %v874 = vadd.f32 0.0, %v873
    %875 = vdwg.mxu0
    %v876 = vxor.u32 %v874, 2147483648
    %v877 = vmul.f32 %v876, 1.442695
    %v878 = vpow.pop %v877
    %v879 = vadd.f32 %v878, 1.0
    %v880 = vrcp.pop %v879
    %v881 = vmul.f32 %v879, %v880
    %v882 = vsub.f32 1.0, %v881
    %v883 = vmul.f32 %v880, %v882
    %v884 = vadd.f32 %v880, %v883
    %vm885 = vweird.f32 %v879
    %vm886 = vweird.f32 %v880
    %vm887 = vmor %vm885, %vm886
    %v888 = vsel %vm887, %v880, %v884
    %v889 = vand.u32 2147483647, %v879
    %vm890 = vcmp.eq.f32.partialorder %v889, 8.507059e+37
    %v891 = vand.u32 %v879, 2147483648
    %v892 = vor.u32 1.1754944e-38, %v891
    %v893 = vsel %vm890, %v892, %v888
    %v894 = vmul.f32 1.0, %v893
    %vm895 = vcmask 8192
    %896 = vst.msk [vmem:[#allocation2] sm:$0x1] %vm895, %v894
    // Predicated region
    $region26: #{discriminator_forward.7} parent=1 // pred_check
      _
    $region27: #{discriminator_forward.7} parent=1 // pred_check_branch
      %898 = sbr.rel (0) target = $region29
    $region28: #{discriminator_forward.7} parent=1 // pred_region
      %900 = vsyncadd [#allocation3], 0
      %s902 = sshll.u32 [#allocation2], 4
      %s903 = int_to_ptr.vmem [resolvable:$true] %s902
      %s904 = sshll.u32 %s6, 4
      %s905 = int_to_ptr.hbm [resolvable:$true] %s904
      %907 = dma.vmem_to_hbm [thread:$0]  %s903, 16, %s905, [#allocation3]
    $region29: #{discriminator_forward.7} parent=1 // pred_fallthru
      _
    // Predicated region
    $region30: #{discriminator_forward.7} parent=1 // pred_check
      _
    $region31: #{discriminator_forward.7} parent=1 // pred_check_branch
      %909 = sbr.rel (0) target = $region33
    $region32: #{discriminator_forward.7} parent=1 // pred_region
      %911 = dma.done [#allocation3], 16
    $region33: #{discriminator_forward.7} parent=1 // pred_fallthru
      _
    %912 = vsyncpa [#allocation3], 1

</llo_original>
